<compile_context>
chip_gen: v6e
topology: v6e:2x2x1
jax: 0.10.0
libtpu: 0.0.40
codegen_flags: <defaults>
</compile_context>

<pallas_src>
import functools

import jax
import jax.numpy as jnp
from jax.experimental import pallas as pl
from jax.experimental.pallas import tpu as pltpu


def _round_up(x, m):
    return (x + m - 1) // m * m


# ----------------------------------------------------------------------------
# Fused Pallas kernel (one grid step == one batch image)
# ----------------------------------------------------------------------------
def _conv_gru_kernel(xw_ref, hw_ref, w1_ref, w2_ref, bg_ref, bc_ref, out_ref,
                     s1_ref, s2_ref, gpad_ref, *, K, Cin, Ch, Wp, Rp, gbase):
    """Fused ConvGRU cell, channel-major 'wide row' layout.

    xw_ref : (Cin, L) bf16  zero-padded x, spatially flattened (row stride Wp)
    hw_ref : (Ch,  L) f32   zero-padded previous hidden, same layout
    w1_ref : (3*Ch, K*K*(Cin+Ch)) bf16  stacked [gates ; candidate-x] weights,
             columns ordered [h taps | x taps], tap-major within each block
    w2_ref : (Ch, K*K*Ch) bf16          candidate-h weights, tap-major columns
    bg_ref : (2*Ch, 1) f32,  bc_ref: (Ch, 1) f32
    out_ref: (Ch, Rp)  input-dtype      next hidden, lane-dense "wide" rows
    s1_ref : (K*K*(Cin+Ch), Rp) bf16    stage-1 im2col slab (scratch)
    s2_ref : (K*K*Ch, Rp) bf16          stage-2 im2col slab (scratch)
    gpad_ref:(Ch, Lg) bf16              padded reset-gated hidden (scratch)

    For output pixel r = i*Wp + j (j < W valid), conv tap (kh, kw) reads flat
    padded position r + kh*Wp + kw, so every tap is a static lane-shifted
    slice of the padded slab.
    """
    p = K // 2
    dc = p * Wp + p                       # flat offset of the centre tap
    d_max = (K - 1) * (Wp + 1)            # largest flat tap offset
    nh = K * K * Ch                       # rows of the h block in slab 1

    xwb = xw_ref[...]                                   # (Cin, L) bf16
    hwf = hw_ref[...]                                   # (Ch,  L) f32
    hwb = hwf.astype(jnp.bfloat16)

    # ---- stage-1 im2col slab: each shifted tap slice built exactly once ----
    for kh in range(K):
        for kw in range(K):
            t = kh * K + kw
            d = kh * Wp + kw
            s1_ref[t * Ch:(t + 1) * Ch, :] = hwb[:, d:d + Rp]
            s1_ref[nh + t * Cin:nh + (t + 1) * Cin, :] = xwb[:, d:d + Rp]

    # ---- one big MXU matmul: gates (rt|ut) + x-half of the candidate -------
    acc1 = jnp.dot(w1_ref[...], s1_ref[...],
                   preferred_element_type=jnp.float32)   # (3*Ch, Rp) f32

    gates = jax.nn.sigmoid(acc1[:2 * Ch, :] + bg_ref[...])
    reset = gates[:Ch, :]
    update = gates[Ch:2 * Ch, :]

    h_c = hwf[:, dc:dc + Rp]                             # centre hidden, f32
    gated = reset * h_c                                  # reset-gated hidden

    # ---- re-pad the gated hidden in VMEM (128-aligned bf16 store) ----------
    # The two halo strips (top padding / trailing positions) are the only
    # read-but-not-overwritten columns; they are tiny, so zero them per step
    # (keeps the kernel correct when the grid is sharded across TensorCores).
    store_off = gbase + dc                               # multiple of 128
    if dc > 0:
        gpad_ref[:, gbase:store_off] = jnp.zeros((Ch, dc), jnp.bfloat16)
        gpad_ref[:, store_off + Rp:gbase + d_max + Rp] = jnp.zeros(
            (Ch, d_max - dc), jnp.bfloat16)
    gpad_ref[:, store_off:store_off + Rp] = gated.astype(jnp.bfloat16)

    # ---- stage-2 im2col slab from the gated hidden + second MXU matmul -----
    for kh in range(K):
        for kw in range(K):
            t = kh * K + kw
            d = gbase + kh * Wp + kw
            s2_ref[t * Ch:(t + 1) * Ch, :] = gpad_ref[:, d:d + Rp]

    acc2 = jnp.dot(w2_ref[...], s2_ref[...],
                   preferred_element_type=jnp.float32)   # (Ch, Rp) f32

    ct = jnp.tanh(acc1[2 * Ch:, :] + acc2 + bc_ref[...])
    out_ref[...] = (update * h_c + (1.0 - update) * ct).astype(out_ref.dtype)


# ----------------------------------------------------------------------------
# Wrapper: layout plumbing + pallas_call
# ----------------------------------------------------------------------------
def conv_gru_cell_forward(x_nchw, hidden_nchw, params, kernel_size):
    """Pallas-backed ConvGRUCell.forward. x: (N,Cin,H,W), hidden: (N,Ch,H,W)|None."""
    N, Cin, H, W = x_nchw.shape
    Ch = params["wc"].shape[0]
    K = kernel_size
    p = K // 2
    Hp, Wp = H + 2 * p, W + 2 * p
    R = H * Wp                                    # meaningful "wide row" columns
    Rp = _round_up(R, 128)                        # lane-dense output width
    d_max = (K - 1) * (Wp + 1)
    L = _round_up(max(Hp * Wp, Rp + d_max), 128)  # padded flattened input width
    gbase = (-(p * Wp + p)) % 128                 # makes the gated store 128-aligned
    Lg = _round_up(gbase + d_max + Rp, 128)
    n1 = K * K * (Cin + Ch)
    n2 = K * K * Ch

    if hidden_nchw is None:
        hidden_nchw = jnp.zeros((N, Ch, H, W), dtype=x_nchw.dtype)

    def widen(t_nchw, dtype):
        # NCHW -> channel-major, spatially zero-padded, flattened.
        C = t_nchw.shape[1]
        tp = jnp.pad(t_nchw.astype(jnp.float32),
                     ((0, 0), (0, 0), (p, p), (p, p)))
        tp = tp.reshape(N, C, Hp * Wp)
        tp = jnp.pad(tp, ((0, 0), (0, 0), (0, L - Hp * Wp)))
        return tp.astype(dtype)

    xw = widen(x_nchw, jnp.bfloat16)              # matmul-only operand
    hw = widen(hidden_nchw, jnp.float32)          # matmul (as bf16) + f32 blend

    def per_tap_cols(w_oihw, lo, hi):
        # (O, I, K, K) -> (O, K*K*(hi-lo)); column index = (kh*K + kw)*nc + c
        w = jnp.transpose(w_oihw[:, lo:hi].astype(jnp.float32), (0, 2, 3, 1))
        return w.reshape(w.shape[0], -1)

    wg, wc = params["wg"], params["wc"]
    # Stacked stage-1 weight: rows [gates (2*Ch) ; candidate-x (Ch)],
    # columns [h taps (K*K*Ch) | x taps (K*K*Cin)]  (matches the slab layout).
    w1 = jnp.concatenate([
        jnp.concatenate([per_tap_cols(wg, Cin, Cin + Ch),
                         per_tap_cols(wg, 0, Cin)], axis=1),
        jnp.concatenate([jnp.zeros((Ch, n2), jnp.float32),
                         per_tap_cols(wc, 0, Cin)], axis=1),
    ], axis=0).astype(jnp.bfloat16)               # (3*Ch, n1)
    w2 = per_tap_cols(wc, Cin, Cin + Ch).astype(jnp.bfloat16)   # (Ch, n2)
    bg = params["bg"].reshape(2 * Ch, 1).astype(jnp.float32)
    bc = params["bc"].reshape(Ch, 1).astype(jnp.float32)

    kernel = functools.partial(_conv_gru_kernel, K=K, Cin=Cin, Ch=Ch, Wp=Wp,
                               Rp=Rp, gbase=gbase)

    out_wide = pl.pallas_call(
        kernel,
        out_shape=jax.ShapeDtypeStruct((N, Ch, Rp), x_nchw.dtype),
        grid=(N,),                                # one image per step, pipelined;
                                                  # on v7x each TC takes one image
        in_specs=[
            pl.BlockSpec((None, Cin, L), lambda b: (b, 0, 0)),
            pl.BlockSpec((None, Ch, L), lambda b: (b, 0, 0)),
            pl.BlockSpec(w1.shape, lambda b: (0, 0)),
            pl.BlockSpec(w2.shape, lambda b: (0, 0)),
            pl.BlockSpec(bg.shape, lambda b: (0, 0)),
            pl.BlockSpec(bc.shape, lambda b: (0, 0)),
        ],
        out_specs=pl.BlockSpec((None, Ch, Rp), lambda b: (b, 0, 0)),
        scratch_shapes=[
            pltpu.VMEM((n1, Rp), jnp.bfloat16),   # stage-1 im2col slab
            pltpu.VMEM((n2, Rp), jnp.bfloat16),   # stage-2 im2col slab
            pltpu.VMEM((Ch, Lg), jnp.bfloat16),   # padded reset-gated hidden
        ],
        compiler_params=pltpu.CompilerParams(
            dimension_semantics=("parallel",)),
    )(xw, hw, w1, w2, bg, bc)

    # Drop the per-row pad columns; output is already channel-major (NCHW),
    # so no transpose is needed on either side of the kernel.
    out = out_wide[:, :, :R].reshape(N, Ch, H, Wp)[:, :, :, :W]
    return out


# ----------------------------------------------------------------------------
# Pure-JAX reference (mirrors the PyTorch forward exactly, in f32)
# ----------------------------------------------------------------------------
def conv_gru_cell_reference(x, h, params, kernel_size):
    p = kernel_size // 2

    def conv(inp, w, b):
        out = jax.lax.conv_general_dilated(
            inp, w, window_strides=(1, 1), padding=[(p, p), (p, p)],
            dimension_numbers=("NCHW", "OIHW", "NCHW"))
        return out + b[None, :, None, None]

    c1 = conv(jnp.concatenate([x, h], axis=1), params["wg"], params["bg"])
    rt, ut = jnp.split(c1, 2, axis=1)
    reset = jax.nn.sigmoid(rt)
    update = jax.nn.sigmoid(ut)
    gated = reset * h
    ct = jnp.tanh(conv(jnp.concatenate([x, gated], axis=1),
                       params["wc"], params["bc"]))
    return update * h + (1.0 - update) * ct


# ----------------------------------------------------------------------------
if __name__ == "__main__":
    # Shapes consistent with ConvGRUCell(input_size=4, hidden_size=8,
    # kernel_size=3, use_coordinates=False).
    N, Cin, Ch, H, W, K = 2, 4, 8, 16, 16, 3

    key = jax.random.PRNGKey(0)
    kx, kh, k1, k2, k3, k4 = jax.random.split(key, 6)

    x = jax.random.normal(kx, (N, Cin, H, W), dtype=jnp.float32)
    hidden = jax.random.uniform(kh, (N, Ch, H, W), dtype=jnp.float32)

    params = {
        "wg": 0.1 * jax.random.normal(k1, (2 * Ch, Cin + Ch, K, K), jnp.float32),
        "bg": 0.1 * jax.random.normal(k2, (2 * Ch,), jnp.float32),
        "wc": 0.1 * jax.random.normal(k3, (Ch, Cin + Ch, K, K), jnp.float32),
        "bc": 0.1 * jax.random.normal(k4, (Ch,), jnp.float32),
    }

    fwd = jax.jit(lambda x_, h_: conv_gru_cell_forward(x_, h_, params, K))
    out = jax.block_until_ready(fwd(x, hidden))
    assert out.shape == (N, Ch, H, W), out.shape

    # Matmul operands are bf16 (accumulation and all gate math in f32), so
    # compare against the exact f32 reference with a bf16-appropriate bound.
    ref_f32 = conv_gru_cell_reference(x, hidden, params, K)
    err_max = float(jnp.max(jnp.abs(out - ref_f32)))
    err_mean = float(jnp.mean(jnp.abs(out - ref_f32)))
    assert err_max < 5e-2, f"max error vs f32 reference too large: {err_max}"
    assert err_mean < 5e-3, f"mean error vs f32 reference too large: {err_mean}"

    # hidden=None path (module initializes hidden to zeros).
    out0 = jax.block_until_ready(
        jax.jit(lambda x_: conv_gru_cell_forward(x_, None, params, K))(x))
    ref0 = conv_gru_cell_reference(
        x, jnp.zeros((N, Ch, H, W), jnp.float32), params, K)
    assert float(jnp.max(jnp.abs(out0 - ref0))) < 5e-2

    print("KERNEL_OK")
</pallas_src>

<mosaic_0001>
module attributes {stable_mosaic.version = 11 : i64} {
  func.func @_conv_gru_kernel(%arg0: i32, %arg1: memref<1x4x512xbf16, #tpu.memory_space<vmem>>, %arg2: memref<1x8x512xf32, #tpu.memory_space<vmem>>, %arg3: memref<24x108xbf16, #tpu.memory_space<vmem>>, %arg4: memref<8x72xbf16, #tpu.memory_space<vmem>>, %arg5: memref<16x1xf32, #tpu.memory_space<vmem>>, %arg6: memref<8x1xf32, #tpu.memory_space<vmem>>, %arg7: memref<1x8x384xf32, #tpu.memory_space<vmem>>, %arg8: memref<108x384xbf16, #tpu.memory_space<vmem>>, %arg9: memref<72x384xbf16, #tpu.memory_space<vmem>>, %arg10: memref<8x640xbf16, #tpu.memory_space<vmem>>) attributes {dimension_semantics = [#tpu.dimension_semantics<parallel>], iteration_bounds = array<i64: 2>, scalar_prefetch = 0 : i64, scratch_operands = 3 : i64, tpu.core_type = #tpu.core_type<tc>, window_params = [{transform_indices = @transform_0, window_bounds = array<i64: 1, 4, 512>}, {transform_indices = @transform_1, window_bounds = array<i64: 1, 8, 512>}, {pipeline_mode = #tpu.pipeline_mode<synchronous>, transform_indices = @transform_2, window_bounds = array<i64: 24, 108>}, {pipeline_mode = #tpu.pipeline_mode<synchronous>, transform_indices = @transform_3, window_bounds = array<i64: 8, 72>}, {pipeline_mode = #tpu.pipeline_mode<synchronous>, transform_indices = @transform_4, window_bounds = array<i64: 16, 1>}, {pipeline_mode = #tpu.pipeline_mode<synchronous>, transform_indices = @transform_5, window_bounds = array<i64: 8, 1>}, {transform_indices = @transform_6, window_bounds = array<i64: 1, 8, 384>}]} {
    %c0 = arith.constant 0 : index
    %c0_0 = arith.constant 0 : index
    %c0_1 = arith.constant 0 : index
    %0 = vector.load %arg1[%c0, %c0_0, %c0_1] : memref<1x4x512xbf16, #tpu.memory_space<vmem>>, vector<1x4x512xbf16>
    %1 = vector.shape_cast %0 : vector<1x4x512xbf16> to vector<4x512xbf16>
    %c0_2 = arith.constant 0 : index
    %c0_3 = arith.constant 0 : index
    %c0_4 = arith.constant 0 : index
    %2 = vector.load %arg2[%c0_2, %c0_3, %c0_4] : memref<1x8x512xf32, #tpu.memory_space<vmem>>, vector<1x8x512xf32>
    %3 = vector.shape_cast %2 : vector<1x8x512xf32> to vector<8x512xf32>
    %4 = arith.truncf %3 : vector<8x512xf32> to vector<8x512xbf16>
    %5 = vector.extract_strided_slice %4 {offsets = [0, 0], sizes = [8, 384], strides = [1, 1]} : vector<8x512xbf16> to vector<8x384xbf16>
    %c0_5 = arith.constant 0 : index
    %c0_6 = arith.constant 0 : index
    %6 = vector.load %arg8[%c0_5, %c0_6] : memref<108x384xbf16, #tpu.memory_space<vmem>>, vector<8x384xbf16>
    tpu.vector_store %arg8[%c0_5, %c0_6], %5 {strides = array<i32>} : memref<108x384xbf16, #tpu.memory_space<vmem>>, vector<8x384xbf16>,
    %7 = vector.extract_strided_slice %1 {offsets = [0, 0], sizes = [4, 384], strides = [1, 1]} : vector<4x512xbf16> to vector<4x384xbf16>
    %c72 = arith.constant 72 : index
    %c0_7 = arith.constant 0 : index
    %8 = vector.load %arg8[%c72, %c0_7] : memref<108x384xbf16, #tpu.memory_space<vmem>>, vector<4x384xbf16>
    tpu.vector_store %arg8[%c72, %c0_7], %7 {strides = array<i32>} : memref<108x384xbf16, #tpu.memory_space<vmem>>, vector<4x384xbf16>,
    %9 = vector.extract_strided_slice %4 {offsets = [0, 1], sizes = [8, 384], strides = [1, 1]} : vector<8x512xbf16> to vector<8x384xbf16>
    %c8 = arith.constant 8 : index
    %c0_8 = arith.constant 0 : index
    %10 = vector.load %arg8[%c8, %c0_8] : memref<108x384xbf16, #tpu.memory_space<vmem>>, vector<8x384xbf16>
    tpu.vector_store %arg8[%c8, %c0_8], %9 {strides = array<i32>} : memref<108x384xbf16, #tpu.memory_space<vmem>>, vector<8x384xbf16>,
    %11 = vector.extract_strided_slice %1 {offsets = [0, 1], sizes = [4, 384], strides = [1, 1]} : vector<4x512xbf16> to vector<4x384xbf16>
    %c76 = arith.constant 76 : index
    %c0_9 = arith.constant 0 : index
    %12 = vector.load %arg8[%c76, %c0_9] : memref<108x384xbf16, #tpu.memory_space<vmem>>, vector<4x384xbf16>
    tpu.vector_store %arg8[%c76, %c0_9], %11 {strides = array<i32>} : memref<108x384xbf16, #tpu.memory_space<vmem>>, vector<4x384xbf16>,
    %13 = vector.extract_strided_slice %4 {offsets = [0, 2], sizes = [8, 384], strides = [1, 1]} : vector<8x512xbf16> to vector<8x384xbf16>
    %c16 = arith.constant 16 : index
    %c0_10 = arith.constant 0 : index
    %14 = vector.load %arg8[%c16, %c0_10] : memref<108x384xbf16, #tpu.memory_space<vmem>>, vector<8x384xbf16>
    tpu.vector_store %arg8[%c16, %c0_10], %13 {strides = array<i32>} : memref<108x384xbf16, #tpu.memory_space<vmem>>, vector<8x384xbf16>,
    %15 = vector.extract_strided_slice %1 {offsets = [0, 2], sizes = [4, 384], strides = [1, 1]} : vector<4x512xbf16> to vector<4x384xbf16>
    %c80 = arith.constant 80 : index
    %c0_11 = arith.constant 0 : index
    %16 = vector.load %arg8[%c80, %c0_11] : memref<108x384xbf16, #tpu.memory_space<vmem>>, vector<4x384xbf16>
    tpu.vector_store %arg8[%c80, %c0_11], %15 {strides = array<i32>} : memref<108x384xbf16, #tpu.memory_space<vmem>>, vector<4x384xbf16>,
    %17 = vector.extract_strided_slice %4 {offsets = [0, 18], sizes = [8, 384], strides = [1, 1]} : vector<8x512xbf16> to vector<8x384xbf16>
    %c24 = arith.constant 24 : index
    %c0_12 = arith.constant 0 : index
    %18 = vector.load %arg8[%c24, %c0_12] : memref<108x384xbf16, #tpu.memory_space<vmem>>, vector<8x384xbf16>
    tpu.vector_store %arg8[%c24, %c0_12], %17 {strides = array<i32>} : memref<108x384xbf16, #tpu.memory_space<vmem>>, vector<8x384xbf16>,
    %19 = vector.extract_strided_slice %1 {offsets = [0, 18], sizes = [4, 384], strides = [1, 1]} : vector<4x512xbf16> to vector<4x384xbf16>
    %c84 = arith.constant 84 : index
    %c0_13 = arith.constant 0 : index
    %20 = vector.load %arg8[%c84, %c0_13] : memref<108x384xbf16, #tpu.memory_space<vmem>>, vector<4x384xbf16>
    tpu.vector_store %arg8[%c84, %c0_13], %19 {strides = array<i32>} : memref<108x384xbf16, #tpu.memory_space<vmem>>, vector<4x384xbf16>,
    %21 = vector.extract_strided_slice %4 {offsets = [0, 19], sizes = [8, 384], strides = [1, 1]} : vector<8x512xbf16> to vector<8x384xbf16>
    %c32 = arith.constant 32 : index
    %c0_14 = arith.constant 0 : index
    %22 = vector.load %arg8[%c32, %c0_14] : memref<108x384xbf16, #tpu.memory_space<vmem>>, vector<8x384xbf16>
    tpu.vector_store %arg8[%c32, %c0_14], %21 {strides = array<i32>} : memref<108x384xbf16, #tpu.memory_space<vmem>>, vector<8x384xbf16>,
    %23 = vector.extract_strided_slice %1 {offsets = [0, 19], sizes = [4, 384], strides = [1, 1]} : vector<4x512xbf16> to vector<4x384xbf16>
    %c88 = arith.constant 88 : index
    %c0_15 = arith.constant 0 : index
    %24 = vector.load %arg8[%c88, %c0_15] : memref<108x384xbf16, #tpu.memory_space<vmem>>, vector<4x384xbf16>
    tpu.vector_store %arg8[%c88, %c0_15], %23 {strides = array<i32>} : memref<108x384xbf16, #tpu.memory_space<vmem>>, vector<4x384xbf16>,
    %25 = vector.extract_strided_slice %4 {offsets = [0, 20], sizes = [8, 384], strides = [1, 1]} : vector<8x512xbf16> to vector<8x384xbf16>
    %c40 = arith.constant 40 : index
    %c0_16 = arith.constant 0 : index
    %26 = vector.load %arg8[%c40, %c0_16] : memref<108x384xbf16, #tpu.memory_space<vmem>>, vector<8x384xbf16>
    tpu.vector_store %arg8[%c40, %c0_16], %25 {strides = array<i32>} : memref<108x384xbf16, #tpu.memory_space<vmem>>, vector<8x384xbf16>,
    %27 = vector.extract_strided_slice %1 {offsets = [0, 20], sizes = [4, 384], strides = [1, 1]} : vector<4x512xbf16> to vector<4x384xbf16>
    %c92 = arith.constant 92 : index
    %c0_17 = arith.constant 0 : index
    %28 = vector.load %arg8[%c92, %c0_17] : memref<108x384xbf16, #tpu.memory_space<vmem>>, vector<4x384xbf16>
    tpu.vector_store %arg8[%c92, %c0_17], %27 {strides = array<i32>} : memref<108x384xbf16, #tpu.memory_space<vmem>>, vector<4x384xbf16>,
    %29 = vector.extract_strided_slice %4 {offsets = [0, 36], sizes = [8, 384], strides = [1, 1]} : vector<8x512xbf16> to vector<8x384xbf16>
    %c48 = arith.constant 48 : index
    %c0_18 = arith.constant 0 : index
    %30 = vector.load %arg8[%c48, %c0_18] : memref<108x384xbf16, #tpu.memory_space<vmem>>, vector<8x384xbf16>
    tpu.vector_store %arg8[%c48, %c0_18], %29 {strides = array<i32>} : memref<108x384xbf16, #tpu.memory_space<vmem>>, vector<8x384xbf16>,
    %31 = vector.extract_strided_slice %1 {offsets = [0, 36], sizes = [4, 384], strides = [1, 1]} : vector<4x512xbf16> to vector<4x384xbf16>
    %c96 = arith.constant 96 : index
    %c0_19 = arith.constant 0 : index
    %32 = vector.load %arg8[%c96, %c0_19] : memref<108x384xbf16, #tpu.memory_space<vmem>>, vector<4x384xbf16>
    tpu.vector_store %arg8[%c96, %c0_19], %31 {strides = array<i32>} : memref<108x384xbf16, #tpu.memory_space<vmem>>, vector<4x384xbf16>,
    %33 = vector.extract_strided_slice %4 {offsets = [0, 37], sizes = [8, 384], strides = [1, 1]} : vector<8x512xbf16> to vector<8x384xbf16>
    %c56 = arith.constant 56 : index
    %c0_20 = arith.constant 0 : index
    %34 = vector.load %arg8[%c56, %c0_20] : memref<108x384xbf16, #tpu.memory_space<vmem>>, vector<8x384xbf16>
    tpu.vector_store %arg8[%c56, %c0_20], %33 {strides = array<i32>} : memref<108x384xbf16, #tpu.memory_space<vmem>>, vector<8x384xbf16>,
    %35 = vector.extract_strided_slice %1 {offsets = [0, 37], sizes = [4, 384], strides = [1, 1]} : vector<4x512xbf16> to vector<4x384xbf16>
    %c100 = arith.constant 100 : index
    %c0_21 = arith.constant 0 : index
    %36 = vector.load %arg8[%c100, %c0_21] : memref<108x384xbf16, #tpu.memory_space<vmem>>, vector<4x384xbf16>
    tpu.vector_store %arg8[%c100, %c0_21], %35 {strides = array<i32>} : memref<108x384xbf16, #tpu.memory_space<vmem>>, vector<4x384xbf16>,
    %37 = vector.extract_strided_slice %4 {offsets = [0, 38], sizes = [8, 384], strides = [1, 1]} : vector<8x512xbf16> to vector<8x384xbf16>
    %c64 = arith.constant 64 : index
    %c0_22 = arith.constant 0 : index
    %38 = vector.load %arg8[%c64, %c0_22] : memref<108x384xbf16, #tpu.memory_space<vmem>>, vector<8x384xbf16>
    tpu.vector_store %arg8[%c64, %c0_22], %37 {strides = array<i32>} : memref<108x384xbf16, #tpu.memory_space<vmem>>, vector<8x384xbf16>,
    %39 = vector.extract_strided_slice %1 {offsets = [0, 38], sizes = [4, 384], strides = [1, 1]} : vector<4x512xbf16> to vector<4x384xbf16>
    %c104 = arith.constant 104 : index
    %c0_23 = arith.constant 0 : index
    %40 = vector.load %arg8[%c104, %c0_23] : memref<108x384xbf16, #tpu.memory_space<vmem>>, vector<4x384xbf16>
    tpu.vector_store %arg8[%c104, %c0_23], %39 {strides = array<i32>} : memref<108x384xbf16, #tpu.memory_space<vmem>>, vector<4x384xbf16>,
    %c0_24 = arith.constant 0 : index
    %c0_25 = arith.constant 0 : index
    %41 = vector.load %arg3[%c0_24, %c0_25] : memref<24x108xbf16, #tpu.memory_space<vmem>>, vector<24x108xbf16>
    %c0_26 = arith.constant 0 : index
    %c0_27 = arith.constant 0 : index
    %42 = vector.load %arg8[%c0_26, %c0_27] : memref<108x384xbf16, #tpu.memory_space<vmem>>, vector<108x384xbf16>
    %cst = arith.constant dense<0.000000e+00> : vector<24x384xf32>
    %43 = tpu.matmul %41, %42, %cst {dimension_numbers = #tpu.dot_dimension_numbers<[1], [0], [0], [1], [0, 0, 1, 1], [], []>} : vector<24x108xbf16>, vector<108x384xbf16>, vector<24x384xf32> -> vector<24x384xf32>
    %44 = vector.extract_strided_slice %43 {offsets = [0, 0], sizes = [16, 384], strides = [1, 1]} : vector<24x384xf32> to vector<16x384xf32>
    %c0_28 = arith.constant 0 : index
    %c0_29 = arith.constant 0 : index
    %45 = vector.load %arg5[%c0_28, %c0_29] : memref<16x1xf32, #tpu.memory_space<vmem>>, vector<16x1xf32>
    %46 = vector.broadcast %45 : vector<16x1xf32> to vector<16x384xf32>
    %47 = arith.addf %44, %46 : vector<16x384xf32>
    %48 = arith.negf %47 : vector<16x384xf32>
    %49 = math.exp %48 : vector<16x384xf32>
    %cst_30 = arith.constant 1.000000e+00 : f32
    %50 = vector.broadcast %cst_30 : f32 to vector<16x384xf32>
    %51 = arith.addf %50, %49 : vector<16x384xf32>
    %52 = arith.divf %50, %51 : vector<16x384xf32>
    %53 = vector.extract_strided_slice %52 {offsets = [0, 0], sizes = [8, 384], strides = [1, 1]} : vector<16x384xf32> to vector<8x384xf32>
    %54 = vector.extract_strided_slice %52 {offsets = [8, 0], sizes = [8, 384], strides = [1, 1]} : vector<16x384xf32> to vector<8x384xf32>
    %55 = vector.extract_strided_slice %3 {offsets = [0, 19], sizes = [8, 384], strides = [1, 1]} : vector<8x512xf32> to vector<8x384xf32>
    %56 = arith.mulf %53, %55 : vector<8x384xf32>
    %cst_31 = arith.constant 0.000000e+00 : bf16
    %57 = vector.broadcast %cst_31 : bf16 to vector<8x19xbf16>
    %c0_32 = arith.constant 0 : index
    %c109 = arith.constant 109 : index
    %58 = vector.load %arg10[%c0_32, %c109] : memref<8x640xbf16, #tpu.memory_space<vmem>>, vector<8x19xbf16>
    tpu.vector_store %arg10[%c0_32, %c109], %57 {strides = array<i32>} : memref<8x640xbf16, #tpu.memory_space<vmem>>, vector<8x19xbf16>,
    %cst_33 = arith.constant 0.000000e+00 : bf16
    %59 = vector.broadcast %cst_33 : bf16 to vector<8x19xbf16>
    %c0_34 = arith.constant 0 : index
    %c512 = arith.constant 512 : index
    %60 = vector.load %arg10[%c0_34, %c512] : memref<8x640xbf16, #tpu.memory_space<vmem>>, vector<8x19xbf16>
    tpu.vector_store %arg10[%c0_34, %c512], %59 {strides = array<i32>} : memref<8x640xbf16, #tpu.memory_space<vmem>>, vector<8x19xbf16>,
    %61 = arith.truncf %56 : vector<8x384xf32> to vector<8x384xbf16>
    %c0_35 = arith.constant 0 : index
    %c128 = arith.constant 128 : index
    %62 = vector.load %arg10[%c0_35, %c128] : memref<8x640xbf16, #tpu.memory_space<vmem>>, vector<8x384xbf16>
    tpu.vector_store %arg10[%c0_35, %c128], %61 {strides = array<i32>} : memref<8x640xbf16, #tpu.memory_space<vmem>>, vector<8x384xbf16>,
    %c0_36 = arith.constant 0 : index
    %c109_37 = arith.constant 109 : index
    %63 = vector.load %arg10[%c0_36, %c109_37] : memref<8x640xbf16, #tpu.memory_space<vmem>>, vector<8x384xbf16>
    %c0_38 = arith.constant 0 : index
    %c0_39 = arith.constant 0 : index
    %64 = vector.load %arg9[%c0_38, %c0_39] : memref<72x384xbf16, #tpu.memory_space<vmem>>, vector<8x384xbf16>
    tpu.vector_store %arg9[%c0_38, %c0_39], %63 {strides = array<i32>} : memref<72x384xbf16, #tpu.memory_space<vmem>>, vector<8x384xbf16>,
    %c0_40 = arith.constant 0 : index
    %c110 = arith.constant 110 : index
    %65 = vector.load %arg10[%c0_40, %c110] : memref<8x640xbf16, #tpu.memory_space<vmem>>, vector<8x384xbf16>
    %c8_41 = arith.constant 8 : index
    %c0_42 = arith.constant 0 : index
    %66 = vector.load %arg9[%c8_41, %c0_42] : memref<72x384xbf16, #tpu.memory_space<vmem>>, vector<8x384xbf16>
    tpu.vector_store %arg9[%c8_41, %c0_42], %65 {strides = array<i32>} : memref<72x384xbf16, #tpu.memory_space<vmem>>, vector<8x384xbf16>,
    %c0_43 = arith.constant 0 : index
    %c111 = arith.constant 111 : index
    %67 = vector.load %arg10[%c0_43, %c111] : memref<8x640xbf16, #tpu.memory_space<vmem>>, vector<8x384xbf16>
    %c16_44 = arith.constant 16 : index
    %c0_45 = arith.constant 0 : index
    %68 = vector.load %arg9[%c16_44, %c0_45] : memref<72x384xbf16, #tpu.memory_space<vmem>>, vector<8x384xbf16>
    tpu.vector_store %arg9[%c16_44, %c0_45], %67 {strides = array<i32>} : memref<72x384xbf16, #tpu.memory_space<vmem>>, vector<8x384xbf16>,
    %c0_46 = arith.constant 0 : index
    %c127 = arith.constant 127 : index
    %69 = vector.load %arg10[%c0_46, %c127] : memref<8x640xbf16, #tpu.memory_space<vmem>>, vector<8x384xbf16>
    %c24_47 = arith.constant 24 : index
    %c0_48 = arith.constant 0 : index
    %70 = vector.load %arg9[%c24_47, %c0_48] : memref<72x384xbf16, #tpu.memory_space<vmem>>, vector<8x384xbf16>
    tpu.vector_store %arg9[%c24_47, %c0_48], %69 {strides = array<i32>} : memref<72x384xbf16, #tpu.memory_space<vmem>>, vector<8x384xbf16>,
    %c0_49 = arith.constant 0 : index
    %c128_50 = arith.constant 128 : index
    %71 = vector.load %arg10[%c0_49, %c128_50] : memref<8x640xbf16, #tpu.memory_space<vmem>>, vector<8x384xbf16>
    %c32_51 = arith.constant 32 : index
    %c0_52 = arith.constant 0 : index
    %72 = vector.load %arg9[%c32_51, %c0_52] : memref<72x384xbf16, #tpu.memory_space<vmem>>, vector<8x384xbf16>
    tpu.vector_store %arg9[%c32_51, %c0_52], %71 {strides = array<i32>} : memref<72x384xbf16, #tpu.memory_space<vmem>>, vector<8x384xbf16>,
    %c0_53 = arith.constant 0 : index
    %c129 = arith.constant 129 : index
    %73 = vector.load %arg10[%c0_53, %c129] : memref<8x640xbf16, #tpu.memory_space<vmem>>, vector<8x384xbf16>
    %c40_54 = arith.constant 40 : index
    %c0_55 = arith.constant 0 : index
    %74 = vector.load %arg9[%c40_54, %c0_55] : memref<72x384xbf16, #tpu.memory_space<vmem>>, vector<8x384xbf16>
    tpu.vector_store %arg9[%c40_54, %c0_55], %73 {strides = array<i32>} : memref<72x384xbf16, #tpu.memory_space<vmem>>, vector<8x384xbf16>,
    %c0_56 = arith.constant 0 : index
    %c145 = arith.constant 145 : index
    %75 = vector.load %arg10[%c0_56, %c145] : memref<8x640xbf16, #tpu.memory_space<vmem>>, vector<8x384xbf16>
    %c48_57 = arith.constant 48 : index
    %c0_58 = arith.constant 0 : index
    %76 = vector.load %arg9[%c48_57, %c0_58] : memref<72x384xbf16, #tpu.memory_space<vmem>>, vector<8x384xbf16>
    tpu.vector_store %arg9[%c48_57, %c0_58], %75 {strides = array<i32>} : memref<72x384xbf16, #tpu.memory_space<vmem>>, vector<8x384xbf16>,
    %c0_59 = arith.constant 0 : index
    %c146 = arith.constant 146 : index
    %77 = vector.load %arg10[%c0_59, %c146] : memref<8x640xbf16, #tpu.memory_space<vmem>>, vector<8x384xbf16>
    %c56_60 = arith.constant 56 : index
    %c0_61 = arith.constant 0 : index
    %78 = vector.load %arg9[%c56_60, %c0_61] : memref<72x384xbf16, #tpu.memory_space<vmem>>, vector<8x384xbf16>
    tpu.vector_store %arg9[%c56_60, %c0_61], %77 {strides = array<i32>} : memref<72x384xbf16, #tpu.memory_space<vmem>>, vector<8x384xbf16>,
    %c0_62 = arith.constant 0 : index
    %c147 = arith.constant 147 : index
    %79 = vector.load %arg10[%c0_62, %c147] : memref<8x640xbf16, #tpu.memory_space<vmem>>, vector<8x384xbf16>
    %c64_63 = arith.constant 64 : index
    %c0_64 = arith.constant 0 : index
    %80 = vector.load %arg9[%c64_63, %c0_64] : memref<72x384xbf16, #tpu.memory_space<vmem>>, vector<8x384xbf16>
    tpu.vector_store %arg9[%c64_63, %c0_64], %79 {strides = array<i32>} : memref<72x384xbf16, #tpu.memory_space<vmem>>, vector<8x384xbf16>,
    %c0_65 = arith.constant 0 : index
    %c0_66 = arith.constant 0 : index
    %81 = vector.load %arg4[%c0_65, %c0_66] : memref<8x72xbf16, #tpu.memory_space<vmem>>, vector<8x72xbf16>
    %c0_67 = arith.constant 0 : index
    %c0_68 = arith.constant 0 : index
    %82 = vector.load %arg9[%c0_67, %c0_68] : memref<72x384xbf16, #tpu.memory_space<vmem>>, vector<72x384xbf16>
    %cst_69 = arith.constant dense<0.000000e+00> : vector<8x384xf32>
    %83 = tpu.matmul %81, %82, %cst_69 {dimension_numbers = #tpu.dot_dimension_numbers<[1], [0], [0], [1], [0, 0, 1, 1], [], []>} : vector<8x72xbf16>, vector<72x384xbf16>, vector<8x384xf32> -> vector<8x384xf32>
    %84 = vector.extract_strided_slice %43 {offsets = [16, 0], sizes = [8, 384], strides = [1, 1]} : vector<24x384xf32> to vector<8x384xf32>
    %85 = arith.addf %84, %83 : vector<8x384xf32>
    %c0_70 = arith.constant 0 : index
    %c0_71 = arith.constant 0 : index
    %86 = vector.load %arg6[%c0_70, %c0_71] : memref<8x1xf32, #tpu.memory_space<vmem>>, vector<8x1xf32>
    %87 = vector.broadcast %86 : vector<8x1xf32> to vector<8x384xf32>
    %88 = arith.addf %85, %87 : vector<8x384xf32>
    %89 = math.tanh %88 : vector<8x384xf32>
    %90 = arith.mulf %54, %55 : vector<8x384xf32>
    %cst_72 = arith.constant 1.000000e+00 : f32
    %91 = vector.broadcast %cst_72 : f32 to vector<8x384xf32>
    %92 = arith.subf %91, %54 : vector<8x384xf32>
    %93 = arith.mulf %92, %89 : vector<8x384xf32>
    %94 = arith.addf %90, %93 : vector<8x384xf32>
    %c0_73 = arith.constant 0 : index
    %c0_74 = arith.constant 0 : index
    %c0_75 = arith.constant 0 : index
    %95 = vector.load %arg7[%c0_73, %c0_74, %c0_75] : memref<1x8x384xf32, #tpu.memory_space<vmem>>, vector<1x8x384xf32>
    %96 = vector.shape_cast %95 : vector<1x8x384xf32> to vector<8x384xf32>
    %97 = vector.shape_cast %94 : vector<8x384xf32> to vector<1x8x384xf32>
    tpu.vector_store %arg7[%c0_73, %c0_74, %c0_75], %97 {strides = array<i32>} : memref<1x8x384xf32, #tpu.memory_space<vmem>>, vector<1x8x384xf32>,
    return
  }
  func.func @transform_0(%arg0: i32) -> (i32, i32, i32) {
    %c0_i32 = arith.constant 0 : i32
    %c0_i32_0 = arith.constant 0 : i32
    %c0_i32_1 = arith.constant 0 : i32
    return %arg0, %c0_i32, %c0_i32_0 : i32, i32, i32
  }
  func.func @transform_1(%arg0: i32) -> (i32, i32, i32) {
    %c0_i32 = arith.constant 0 : i32
    %c0_i32_0 = arith.constant 0 : i32
    %c0_i32_1 = arith.constant 0 : i32
    return %arg0, %c0_i32, %c0_i32_0 : i32, i32, i32
  }
  func.func @transform_2(%arg0: i32) -> (i32, i32) {
    %c0_i32 = arith.constant 0 : i32
    %c0_i32_0 = arith.constant 0 : i32
    %c0_i32_1 = arith.constant 0 : i32
    return %c0_i32, %c0_i32_0 : i32, i32
  }
  func.func @transform_3(%arg0: i32) -> (i32, i32) {
    %c0_i32 = arith.constant 0 : i32
    %c0_i32_0 = arith.constant 0 : i32
    %c0_i32_1 = arith.constant 0 : i32
    return %c0_i32, %c0_i32_0 : i32, i32
  }
  func.func @transform_4(%arg0: i32) -> (i32, i32) {
    %c0_i32 = arith.constant 0 : i32
    %c0_i32_0 = arith.constant 0 : i32
    %c0_i32_1 = arith.constant 0 : i32
    return %c0_i32, %c0_i32_0 : i32, i32
  }
  func.func @transform_5(%arg0: i32) -> (i32, i32) {
    %c0_i32 = arith.constant 0 : i32
    %c0_i32_0 = arith.constant 0 : i32
    %c0_i32_1 = arith.constant 0 : i32
    return %c0_i32, %c0_i32_0 : i32, i32
  }
  func.func @transform_6(%arg0: i32) -> (i32, i32, i32) {
    %c0_i32 = arith.constant 0 : i32
    %c0_i32_0 = arith.constant 0 : i32
    %c0_i32_1 = arith.constant 0 : i32
    return %arg0, %c0_i32, %c0_i32_0 : i32, i32, i32
  }
}

</mosaic_0001>

<llo_original>
// kernel: _lambda_.1
$region0: #{_lambda_.1}
  #allocation0 [shape = 'u32[]', space=smem, size = 0x4, offset = 0x4, fixed_abs, tag = 'smem constant byte address 0x4 - core index']
  #allocation1 [shape = 'u32[144,128]{1,0:T(1,128)}', space=vmem, size = 0x12000, scoped, tag = 'internal scratch']
  #allocation2 [shape = 'bf16[108,384]{1,0:T(8,128)(2,1)}', space=vmem, size = 0x15000, scoped, tag = 'scratch operand']
  #allocation3 [shape = 'bf16[72,384]{1,0:T(8,128)(2,1)}', space=vmem, size = 0xd800, scoped, tag = 'scratch operand']
  #allocation4 [shape = 'bf16[8,640]{1,0:T(8,128)(2,1)}', space=vmem, size = 0x2800, scoped, tag = 'scratch operand']
  %s0 = inlined_call_operand.vmem [shape: bf16[2,4,512], index: 0, kind: input, shape index: {}]
  %s1 = inlined_call_operand.vmem [shape: f32[2,8,512], index: 1, kind: input, shape index: {}]
  %s2 = inlined_call_operand.vmem [shape: bf16[24,108], index: 2, kind: input, shape index: {}]
  %s3 = inlined_call_operand.vmem [shape: bf16[8,72], index: 3, kind: input, shape index: {}]
  %s4 = inlined_call_operand.vmem [shape: f32[16,1], index: 4, kind: input, shape index: {}]
  %s5 = inlined_call_operand.vmem [shape: f32[8,1], index: 5, kind: input, shape index: {}]
  %s6 = inlined_call_operand.vmem [shape: f32[2,8,384], index: 6, kind: output, shape index: {}]
  %s7 = sld [smem:[#allocation0]]
  $region57: #{_lambda_.1} parent=0
    _
  %s9 = ssub.s32 1, %s7
  %s10 = scalar_select 0, %s9, %s7
  loop: start=0, step=1, limit=4
  $region2: #{_lambda_.1} parent=0 // loop_pre_header
    _
  $region3: #{_lambda_.1} parent=0 // loop_header
    %s12 = sphi 0, %s16
    %p13 = scmp.ge.s32.totalorder %s12, 4
    %s22 = sphi 0, %s24
    %s25 = sphi 0, %s22
    %s26 = sphi 0, %s25
    %s42 = sphi 0, %s26
    %s48 = sphi 0, %s50
    %s51 = sphi 0, %s48
    %s52 = sphi 0, %s51
    %s68 = sphi 0, %s52
    %s72 = sphi 0, %s72
    %s74 = sphi 0, %s72
    %s75 = sphi 0, %s74
    %s89 = sphi 0, %s75
    %s93 = sphi 0, %s93
    %s95 = sphi 0, %s93
    %s96 = sphi 0, %s95
    %s110 = sphi 0, %s96
    %s114 = sphi 0, %s114
    %s116 = sphi 0, %s114
    %s117 = sphi 0, %s116
    %s131 = sphi 0, %s117
    %s135 = sphi 0, %s135
    %s137 = sphi 0, %s135
    %s138 = sphi 0, %s137
    %s152 = sphi 0, %s138
    %s158 = sphi 0, %s160
    %s161 = sphi 0, %s158
    %s162 = sphi 0, %s161
    %s178 = sphi 0, %s162
  $region4: #{_lambda_.1} parent=0 // loop_header_branch
    %15 = sbr.rel (%p13) target = $region8
  $region5: #{_lambda_.1} parent=0 // loop_body
    %s17 = ssub.s32 %s12, 1
    %s18 = ssub.s32 %s12, 2
    %s19 = sadd.s32 %s12, 1
    %s20 = ssub.s32 %s12, %s19
    %p21 = scmp.eq.s32.totalorder %s20, 0
    %s23 = sadd.s32 %s22, 1
    %s24 = scalar_select %p21, %s22, %s23
    %p27 = pneg %p21
    %p28 = scmp.eq.s32.totalorder %s12, 1
    %p29 = por %p27, %p28
    %p30 = scmp.ne.s32.totalorder %s22, %s25
    %p31 = scmp.eq.s32.totalorder %s12, 0
    %p32 = por %p30, %p31
    %p33 = scmp.ne.s32.totalorder %s22, %s25
    %p34 = scmp.eq.s32.totalorder %s17, 1
    %p35 = por %p33, %p34
    %p36 = scmp.ne.s32.totalorder %s25, %s26
    %p37 = scmp.eq.s32.totalorder %s17, 0
    %p38 = por %p36, %p37
    %p39 = scmp.ne.s32.totalorder %s25, %s26
    %p40 = scmp.eq.s32.totalorder %s18, 1
    %p41 = por %p39, %p40
    %p43 = scmp.ne.s32.totalorder %s26, %s42
    %p44 = scmp.eq.s32.totalorder %s18, 0
    %p45 = por %p43, %p44
    %s46 = ssub.s32 %s12, %s19
    %p47 = scmp.eq.s32.totalorder %s46, 0
    %s49 = sadd.s32 %s48, 1
    %s50 = scalar_select %p47, %s48, %s49
    %p53 = pneg %p47
    %p54 = scmp.eq.s32.totalorder %s12, 1
    %p55 = por %p53, %p54
    %p56 = scmp.ne.s32.totalorder %s48, %s51
    %p57 = scmp.eq.s32.totalorder %s12, 0
    %p58 = por %p56, %p57
    %p59 = scmp.ne.s32.totalorder %s48, %s51
    %p60 = scmp.eq.s32.totalorder %s17, 1
    %p61 = por %p59, %p60
    %p62 = scmp.ne.s32.totalorder %s51, %s52
    %p63 = scmp.eq.s32.totalorder %s17, 0
    %p64 = por %p62, %p63
    %p65 = scmp.ne.s32.totalorder %s51, %s52
    %p66 = scmp.eq.s32.totalorder %s18, 1
    %p67 = por %p65, %p66
    %p69 = scmp.ne.s32.totalorder %s52, %s68
    %p70 = scmp.eq.s32.totalorder %s18, 0
    %p71 = por %p69, %p70
    %s73 = sadd.s32 %s72, 1
    %p76 = scmp.eq.s32.totalorder %s12, 1
    %p77 = scmp.ne.s32.totalorder %s72, %s74
    %p78 = scmp.eq.s32.totalorder %s12, 0
    %p79 = por %p77, %p78
    %p80 = scmp.ne.s32.totalorder %s72, %s74
    %p81 = scmp.eq.s32.totalorder %s17, 1
    %p82 = por %p80, %p81
    %p83 = scmp.ne.s32.totalorder %s74, %s75
    %p84 = scmp.eq.s32.totalorder %s17, 0
    %p85 = por %p83, %p84
    %p86 = scmp.ne.s32.totalorder %s74, %s75
    %p87 = scmp.eq.s32.totalorder %s18, 1
    %p88 = por %p86, %p87
    %p90 = scmp.ne.s32.totalorder %s75, %s89
    %p91 = scmp.eq.s32.totalorder %s18, 0
    %p92 = por %p90, %p91
    %s94 = sadd.s32 %s93, 1
    %p97 = scmp.eq.s32.totalorder %s12, 1
    %p98 = scmp.ne.s32.totalorder %s93, %s95
    %p99 = scmp.eq.s32.totalorder %s12, 0
    %p100 = por %p98, %p99
    %p101 = scmp.ne.s32.totalorder %s93, %s95
    %p102 = scmp.eq.s32.totalorder %s17, 1
    %p103 = por %p101, %p102
    %p104 = scmp.ne.s32.totalorder %s95, %s96
    %p105 = scmp.eq.s32.totalorder %s17, 0
    %p106 = por %p104, %p105
    %p107 = scmp.ne.s32.totalorder %s95, %s96
    %p108 = scmp.eq.s32.totalorder %s18, 1
    %p109 = por %p107, %p108
    %p111 = scmp.ne.s32.totalorder %s96, %s110
    %p112 = scmp.eq.s32.totalorder %s18, 0
    %p113 = por %p111, %p112
    %s115 = sadd.s32 %s114, 1
    %p118 = scmp.eq.s32.totalorder %s12, 1
    %p119 = scmp.ne.s32.totalorder %s114, %s116
    %p120 = scmp.eq.s32.totalorder %s12, 0
    %p121 = por %p119, %p120
    %p122 = scmp.ne.s32.totalorder %s114, %s116
    %p123 = scmp.eq.s32.totalorder %s17, 1
    %p124 = por %p122, %p123
    %p125 = scmp.ne.s32.totalorder %s116, %s117
    %p126 = scmp.eq.s32.totalorder %s17, 0
    %p127 = por %p125, %p126
    %p128 = scmp.ne.s32.totalorder %s116, %s117
    %p129 = scmp.eq.s32.totalorder %s18, 1
    %p130 = por %p128, %p129
    %p132 = scmp.ne.s32.totalorder %s117, %s131
    %p133 = scmp.eq.s32.totalorder %s18, 0
    %p134 = por %p132, %p133
    %s136 = sadd.s32 %s135, 1
    %p139 = scmp.eq.s32.totalorder %s12, 1
    %p140 = scmp.ne.s32.totalorder %s135, %s137
    %p141 = scmp.eq.s32.totalorder %s12, 0
    %p142 = por %p140, %p141
    %p143 = scmp.ne.s32.totalorder %s135, %s137
    %p144 = scmp.eq.s32.totalorder %s17, 1
    %p145 = por %p143, %p144
    %p146 = scmp.ne.s32.totalorder %s137, %s138
    %p147 = scmp.eq.s32.totalorder %s17, 0
    %p148 = por %p146, %p147
    %p149 = scmp.ne.s32.totalorder %s137, %s138
    %p150 = scmp.eq.s32.totalorder %s18, 1
    %p151 = por %p149, %p150
    %p153 = scmp.ne.s32.totalorder %s138, %s152
    %p154 = scmp.eq.s32.totalorder %s18, 0
    %p155 = por %p153, %p154
    %s156 = ssub.s32 %s12, %s19
    %p157 = scmp.eq.s32.totalorder %s156, 0
    %s159 = sadd.s32 %s158, 1
    %s160 = scalar_select %p157, %s158, %s159
    %p163 = pneg %p157
    %p164 = scmp.eq.s32.totalorder %s12, 1
    %p165 = por %p163, %p164
    %p166 = scmp.ne.s32.totalorder %s158, %s161
    %p167 = scmp.eq.s32.totalorder %s12, 0
    %p168 = por %p166, %p167
    %p169 = scmp.ne.s32.totalorder %s158, %s161
    %p170 = scmp.eq.s32.totalorder %s17, 1
    %p171 = por %p169, %p170
    %p172 = scmp.ne.s32.totalorder %s161, %s162
    %p173 = scmp.eq.s32.totalorder %s17, 0
    %p174 = por %p172, %p173
    %p175 = scmp.ne.s32.totalorder %s161, %s162
    %p176 = scmp.eq.s32.totalorder %s18, 1
    %p177 = por %p175, %p176
    %p179 = scmp.ne.s32.totalorder %s162, %s178
    %p180 = scmp.eq.s32.totalorder %s18, 0
    %p181 = por %p179, %p180
    %p182 = scmp.le.s32.totalorder 1, %s12
    %p183 = scmp.lt.s32.totalorder %s12, 3
    %p184 = pnand %p182, %p183
    %p185 = pneg %p184
    // Predicated region
    $region9: #{_lambda_.1} parent=5 // pred_check
      _
    $region10: #{_lambda_.1} parent=5 // pred_check_branch
      %187 = sbr.rel (%p184) target = $region12
    $region11: #{_lambda_.1} parent=5 // pred_region
      %s188 = ssub.s32 %s12, 1
      // Predicated region
      $region13: #{_lambda_.1} parent=11 // pred_check
        %p189 = pneg %p85
      $region14: #{_lambda_.1} parent=11 // pred_check_branch
        %191 = sbr.rel (%p189) target = $region16
      $region15: #{_lambda_.1} parent=11 // pred_region
        _
      $region16: #{_lambda_.1} parent=11 // pred_fallthru
        _
      // Predicated region
      $region17: #{_lambda_.1} parent=11 // pred_check
        %p192 = pneg %p106
      $region18: #{_lambda_.1} parent=11 // pred_check_branch
        %194 = sbr.rel (%p192) target = $region20
      $region19: #{_lambda_.1} parent=11 // pred_region
        _
      $region20: #{_lambda_.1} parent=11 // pred_fallthru
        _
      // Predicated region
      $region21: #{_lambda_.1} parent=11 // pred_check
        %p195 = pneg %p127
      $region22: #{_lambda_.1} parent=11 // pred_check_branch
        %197 = sbr.rel (%p195) target = $region24
      $region23: #{_lambda_.1} parent=11 // pred_region
        _
      $region24: #{_lambda_.1} parent=11 // pred_fallthru
        _
      // Predicated region
      $region25: #{_lambda_.1} parent=11 // pred_check
        %p198 = pneg %p148
      $region26: #{_lambda_.1} parent=11 // pred_check_branch
        %200 = sbr.rel (%p198) target = $region28
      $region27: #{_lambda_.1} parent=11 // pred_region
        _
      $region28: #{_lambda_.1} parent=11 // pred_fallthru
        _
    $region12: #{_lambda_.1} parent=5 // pred_fallthru
      _
    %p201 = scmp.lt.s32.totalorder %s12, 2
    // Predicated region
    $region29: #{_lambda_.1} parent=5 // pred_check
      %p202 = pneg %p201
    $region30: #{_lambda_.1} parent=5 // pred_check_branch
      %204 = sbr.rel (%p202) target = $region32
    $region31: #{_lambda_.1} parent=5 // pred_region
      // Predicated region
      $region33: #{_lambda_.1} parent=31 // pred_check
        %p205 = pneg %p32
      $region34: #{_lambda_.1} parent=31 // pred_check_branch
        %207 = sbr.rel (%p205) target = $region36
      $region35: #{_lambda_.1} parent=31 // pred_region
        %p208 = scmp.lt.s32.totalorder %s12, 1
        %s209 = scalar_select %p208, %s12, 1
        %s210 = smul.addr %s209, 4
        %s211 = smul.addr %s210, 2
        %s212 = scalar_lea.vmem %s0, %s211
      $region36: #{_lambda_.1} parent=31 // pred_fallthru
        _
      // Predicated region
      $region37: #{_lambda_.1} parent=31 // pred_check
        %p213 = pneg %p58
      $region38: #{_lambda_.1} parent=31 // pred_check_branch
        %215 = sbr.rel (%p213) target = $region40
      $region39: #{_lambda_.1} parent=31 // pred_region
        %p216 = scmp.lt.s32.totalorder %s12, 1
        %s217 = scalar_select %p216, %s12, 1
        %s218 = smul.addr %s217, 4
        %s219 = smul.addr %s218, 8
        %s220 = scalar_lea.vmem %s1, %s219
      $region40: #{_lambda_.1} parent=31 // pred_fallthru
        _
    $region32: #{_lambda_.1} parent=5 // pred_fallthru
      _
    %p221 = scmp.le.s32.totalorder 1, %s12
    %p222 = scmp.lt.s32.totalorder %s12, 3
    %p223 = pnand %p221, %p222
    %p224 = pneg %p223
    // Predicated region
    $region41: #{_lambda_.1} parent=5 // pred_check
      _
    $region42: #{_lambda_.1} parent=5 // pred_check_branch
      %226 = sbr.rel (%p223) target = $region44
    $region43: #{_lambda_.1} parent=5 // pred_region
      %s227 = ssub.s32 %s12, 1
      %p228 = scmp.lt.s32.totalorder %s17, 1
      %s229 = scalar_select %p228, %s17, 1
      %s230 = smul.addr %s229, 4
      %s231 = smul.addr %s230, 2
      %s232 = scalar_lea.vmem %s0, %s231
      %p233 = pneg %p38
      %p234 = pneg %p35
      %p235 = scmp.lt.s32.totalorder %s17, 1
      %s236 = scalar_select %p235, %s17, 1
      %s237 = smul.addr %s236, 4
      %s238 = smul.addr %s237, 8
      %s239 = scalar_lea.vmem %s1, %s238
      %p240 = pneg %p64
      %p241 = pneg %p61
      %p242 = pneg %p85
      %p243 = pneg %p82
      %p244 = pneg %p106
      %p245 = pneg %p103
      %p246 = pneg %p127
      %p247 = pneg %p124
      %p248 = pneg %p148
      %p249 = pneg %p145
      %p250 = pneg %p174
      %p251 = pneg %p171
      %p252 = scmp.lt.s32.totalorder %s17, 1
      %s253 = scalar_select %p252, %s17, 1
      %s254 = smul.addr %s253, 3
      %s255 = smul.addr %s254, 8
      %s256 = scalar_lea.vmem %s6, %s255
      %p257 = scmp.lt.s32.totalorder %s17, 1
      %s258 = scalar_select %p257, %s17, 1
      %s259 = smul.addr %s258, 4
      %s260 = smul.addr %s259, 2
      %s261 = scalar_lea.vmem %s0, %s260
      %p262 = scmp.lt.s32.totalorder %s17, 1
      %s263 = scalar_select %p262, %s17, 1
      %s264 = smul.addr %s263, 4
      %s265 = smul.addr %s264, 8
      %s266 = scalar_lea.vmem %s1, %s265
      %p267 = scmp.lt.s32.totalorder %s17, 1
      %s268 = scalar_select %p267, %s17, 1
      %s269 = smul.addr %s268, 3
      %s270 = smul.addr %s269, 8
      %s271 = scalar_lea.vmem %s6, %s270
      %v273 = vld [vmem:[%s261] sm:$0xff]
      %v274 = vld [vmem:[%s266] sm:$0xff]
      %v275 = vld [vmem:[%s266 + $0x8] sm:$0xff]
      %v276 = vld [vmem:[%s266 + $0x10] sm:$0xff]
      %v277 = vld [vmem:[%s266 + $0x18] sm:$0xff]
      %v278 = vpack.c.bf16 %v274, %v274
      %v279 = vpack.c.bf16 %v275, %v275
      %v280 = vpack.c.bf16 %v276, %v276
      %v281 = vpack.c.bf16 %v277, %v277
      %v285 = vunpack.c.l.b16 %v278
      %v286 = vunpack.c.l.b16 %v279
      %v287 = vunpack.c.l.b16 %v280
      %v288 = vpack.c.b16 %v286, %v285
      %v289 = vpack.c.b16 %v287, %v287
      %292 = vst [vmem:[#allocation2] sm:$0xff] %v288
      %293 = vst [vmem:[#allocation2 + $0x8] sm:$0xf] %v289
      %v295 = vcombine.high %v273, %v273
      %v297 = vunpack.c.l.s4 1983009808
      %v298 = vunpack.c.0.s8 %v297
      %v299 = vlaneseq
      %v300 = vshrl.u32 %v299, 7
      %v301 = vsub.s32 %v298, %v300
      %v302 = vrot.slane %v273, %v301
      %v304 = vunpack.c.l.s4 1983009808
      %v305 = vunpack.c.0.s8 %v304
      %v306 = vlaneseq
      %v307 = vshrl.u32 %v306, 7
      %v308 = vsub.s32 %v305, %v307
      %v309 = vrot.slane %v295, %v308
      %312 = vst [vmem:[#allocation2 + $0x6c] sm:$0x33] %v302
      %313 = vst [vmem:[#allocation2 + $0x74] sm:$0x3] %v309
      %v315 = vunpack.c.l.b16 %v281
      %v316 = vpack.c.b16 %v315, %v287
      %317 = vrot.lane.b32.xlu0 %v288, 127
      %v318 = vpop.permute.xlu0 %317
      %319 = vrot.lane.b32.xlu0 %v316, 127
      %v320 = vpop.permute.xlu0 %319
      %v321 = vrot.slane %v318, 4
      %v322 = vrot.slane %v320, 4
      %vm323 = vcmask 1043456
      %v324 = vsel %vm323, %v321, %v322
      %vm325 = vcmask 1039360
      %v326 = vsel %vm325, %v318, %v324
      %v327 = vsel %vm325, %v320, %v322
      %330 = vst [vmem:[#allocation2 + $0xc] sm:$0xff] %v326
      %331 = vst [vmem:[#allocation2 + $0x14] sm:$0xf] %v327
      %v332 = vcombine.low %v273, %v273
      %v334 = vunpack.c.l.s4 1983009808
      %v335 = vunpack.c.0.s8 %v334
      %v336 = vlaneseq
      %v337 = vshrl.u32 %v336, 7
      %v338 = vsub.s32 %v335, %v337
      %v339 = vrot.slane %v332, %v338
      %340 = vrot.lane.b32.xlu0 %v339, 127
      %v341 = vpop.permute.xlu0 %340
      %342 = vrot.lane.b32.xlu0 %v302, 127
      %v343 = vpop.permute.xlu0 %342
      %v344 = vrot.slane %v341, 4
      %v345 = vrot.slane %v343, 4
      %v346 = vsel %vm323, %v344, %v345
      %v347 = vsel %vm325, %v341, %v346
      %v348 = vsel %vm325, %v343, %v345
      %351 = vst [vmem:[#allocation2 + $0x6c] sm:$0xcc] %v347
      %352 = vst [vmem:[#allocation2 + $0x74] sm:$0xc] %v348
      %353 = vrot.lane.b32.xlu0 %v288, 126
      %v354 = vpop.permute.xlu0 %353
      %355 = vrot.lane.b32.xlu0 %v316, 126
      %v356 = vpop.permute.xlu0 %355
      %v357 = vrot.slane %v354, 4
      %v358 = vrot.slane %v356, 4
      %v359 = vsel %vm323, %v357, %v358
      %vm360 = vcmask 1031168
      %v361 = vsel %vm360, %v354, %v359
      %v362 = vsel %vm360, %v356, %v358
      %365 = vst [vmem:[#allocation2 + $0x18] sm:$0xff] %v361
      %366 = vst [vmem:[#allocation2 + $0x20] sm:$0xf] %v362
      %367 = vrot.lane.b32.xlu0 %v302, 126
      %v368 = vpop.permute.xlu0 %367
      %369 = vrot.lane.b32.xlu0 %v309, 126
      %v370 = vpop.permute.xlu0 %369
      %v371 = vrot.slane %v368, 4
      %v372 = vrot.slane %v370, 4
      %v373 = vsel %vm323, %v371, %v372
      %v374 = vsel %vm360, %v368, %v373
      %v375 = vsel %vm360, %v370, %v372
      %378 = vst [vmem:[#allocation2 + $0x78] sm:$0x33] %v374
      %379 = vst [vmem:[#allocation2 + $0x80] sm:$0x3] %v375
      %380 = vrot.lane.b32.xlu0 %v288, 110
      %v381 = vpop.permute.xlu0 %380
      %382 = vrot.lane.b32.xlu0 %v316, 110
      %v383 = vpop.permute.xlu0 %382
      %v384 = vrot.slane %v381, 4
      %v385 = vrot.slane %v383, 4
      %v386 = vsel %vm323, %v384, %v385
      %vm387 = vcmask 900096
      %v388 = vsel %vm387, %v381, %v386
      %v389 = vsel %vm387, %v383, %v385
      %392 = vst [vmem:[#allocation2 + $0x24] sm:$0xff] %v388
      %393 = vst [vmem:[#allocation2 + $0x2c] sm:$0xf] %v389
      %394 = vrot.lane.b32.xlu0 %v339, 110
      %v395 = vpop.permute.xlu0 %394
      %396 = vrot.lane.b32.xlu0 %v302, 110
      %v397 = vpop.permute.xlu0 %396
      %v398 = vrot.slane %v395, 4
      %v399 = vrot.slane %v397, 4
      %v400 = vsel %vm323, %v398, %v399
      %v401 = vsel %vm387, %v395, %v400
      %v402 = vsel %vm387, %v397, %v399
      %405 = vst [vmem:[#allocation2 + $0x78] sm:$0xcc] %v401
      %406 = vst [vmem:[#allocation2 + $0x80] sm:$0xc] %v402
      %407 = vrot.lane.b32.xlu0 %v288, 109
      %v408 = vpop.permute.xlu0 %407
      %409 = vrot.lane.b32.xlu0 %v316, 109
      %v410 = vpop.permute.xlu0 %409
      %v411 = vrot.slane %v408, 4
      %v412 = vrot.slane %v410, 4
      %v413 = vsel %vm323, %v411, %v412
      %vm414 = vcmask 891904
      %v415 = vsel %vm414, %v408, %v413
      %v416 = vsel %vm414, %v410, %v412
      %419 = vst [vmem:[#allocation2 + $0x30] sm:$0xff] %v415
      %420 = vst [vmem:[#allocation2 + $0x38] sm:$0xf] %v416
      %421 = vrot.lane.b32.xlu0 %v302, 109
      %v422 = vpop.permute.xlu0 %421
      %423 = vrot.lane.b32.xlu0 %v309, 109
      %v424 = vpop.permute.xlu0 %423
      %v425 = vrot.slane %v422, 4
      %v426 = vrot.slane %v424, 4
      %v427 = vsel %vm323, %v425, %v426
      %v428 = vsel %vm414, %v422, %v427
      %v429 = vsel %vm414, %v424, %v426
      %432 = vst [vmem:[#allocation2 + $0x84] sm:$0x33] %v428
      %433 = vst [vmem:[#allocation2 + $0x8c] sm:$0x3] %v429
      %434 = vrot.lane.b32.xlu0 %v288, 108
      %v435 = vpop.permute.xlu0 %434
      %436 = vrot.lane.b32.xlu0 %v316, 108
      %v437 = vpop.permute.xlu0 %436
      %v438 = vrot.slane %v435, 4
      %v439 = vrot.slane %v437, 4
      %v440 = vsel %vm323, %v438, %v439
      %vm441 = vcmask 883712
      %v442 = vsel %vm441, %v435, %v440
      %v443 = vsel %vm441, %v437, %v439
      %446 = vst [vmem:[#allocation2 + $0x3c] sm:$0xff] %v442
      %447 = vst [vmem:[#allocation2 + $0x44] sm:$0xf] %v443
      %448 = vrot.lane.b32.xlu0 %v339, 108
      %v449 = vpop.permute.xlu0 %448
      %450 = vrot.lane.b32.xlu0 %v302, 108
      %v451 = vpop.permute.xlu0 %450
      %v452 = vrot.slane %v449, 4
      %v453 = vrot.slane %v451, 4
      %v454 = vsel %vm323, %v452, %v453
      %v455 = vsel %vm441, %v449, %v454
      %v456 = vsel %vm441, %v451, %v453
      %459 = vst [vmem:[#allocation2 + $0x84] sm:$0xcc] %v455
      %460 = vst [vmem:[#allocation2 + $0x8c] sm:$0xc] %v456
      %461 = vrot.lane.b32.xlu0 %v288, 92
      %v462 = vpop.permute.xlu0 %461
      %463 = vrot.lane.b32.xlu0 %v316, 92
      %v464 = vpop.permute.xlu0 %463
      %v465 = vrot.slane %v462, 4
      %v466 = vrot.slane %v464, 4
      %v467 = vsel %vm323, %v465, %v466
      %vm468 = vcmask 752640
      %v469 = vsel %vm468, %v462, %v467
      %v470 = vsel %vm468, %v464, %v466
      %473 = vst [vmem:[#allocation2 + $0x48] sm:$0xff] %v469
      %474 = vst [vmem:[#allocation2 + $0x50] sm:$0xf] %v470
      %475 = vrot.lane.b32.xlu0 %v302, 92
      %v476 = vpop.permute.xlu0 %475
      %477 = vrot.lane.b32.xlu0 %v309, 92
      %v478 = vpop.permute.xlu0 %477
      %v479 = vrot.slane %v476, 4
      %v480 = vrot.slane %v478, 4
      %v481 = vsel %vm323, %v479, %v480
      %v482 = vsel %vm468, %v476, %v481
      %v483 = vsel %vm468, %v478, %v480
      %486 = vst [vmem:[#allocation2 + $0x90] sm:$0x33] %v482
      %487 = vst [vmem:[#allocation2 + $0x98] sm:$0x3] %v483
      %488 = vrot.lane.b32.xlu0 %v288, 91
      %v489 = vpop.permute.xlu0 %488
      %490 = vrot.lane.b32.xlu0 %v316, 91
      %v491 = vpop.permute.xlu0 %490
      %v492 = vrot.slane %v489, 4
      %v493 = vrot.slane %v491, 4
      %v494 = vsel %vm323, %v492, %v493
      %vm495 = vcmask 744448
      %v496 = vsel %vm495, %v489, %v494
      %v497 = vsel %vm495, %v491, %v493
      %500 = vst [vmem:[#allocation2 + $0x54] sm:$0xff] %v496
      %501 = vst [vmem:[#allocation2 + $0x5c] sm:$0xf] %v497
      %502 = vrot.lane.b32.xlu0 %v339, 91
      %v503 = vpop.permute.xlu0 %502
      %504 = vrot.lane.b32.xlu0 %v302, 91
      %v505 = vpop.permute.xlu0 %504
      %v506 = vrot.slane %v503, 4
      %v507 = vrot.slane %v505, 4
      %v508 = vsel %vm323, %v506, %v507
      %v509 = vsel %vm495, %v503, %v508
      %v510 = vsel %vm495, %v505, %v507
      %513 = vst [vmem:[#allocation2 + $0x90] sm:$0xcc] %v509
      %514 = vst [vmem:[#allocation2 + $0x98] sm:$0xc] %v510
      %515 = vrot.lane.b32.xlu0 %v288, 90
      %v516 = vpop.permute.xlu0 %515
      %517 = vrot.lane.b32.xlu0 %v316, 90
      %v518 = vpop.permute.xlu0 %517
      %v519 = vrot.slane %v516, 4
      %v520 = vrot.slane %v518, 4
      %v521 = vsel %vm323, %v519, %v520
      %vm522 = vcmask 736256
      %v523 = vsel %vm522, %v516, %v521
      %v524 = vsel %vm522, %v518, %v520
      %527 = vst [vmem:[#allocation2 + $0x60] sm:$0xff] %v523
      %528 = vst [vmem:[#allocation2 + $0x68] sm:$0xf] %v524
      %529 = vrot.lane.b32.xlu0 %v302, 90
      %v530 = vpop.permute.xlu0 %529
      %531 = vrot.lane.b32.xlu0 %v309, 90
      %v532 = vpop.permute.xlu0 %531
      %v533 = vrot.slane %v530, 4
      %v534 = vrot.slane %v532, 4
      %v535 = vsel %vm323, %v533, %v534
      %v536 = vsel %vm522, %v530, %v535
      %v537 = vsel %vm522, %v532, %v534
      %540 = vst [vmem:[#allocation2 + $0x9c] sm:$0x33] %v536
      %541 = vst [vmem:[#allocation2 + $0xa4] sm:$0x3] %v537
      %v542 = vld [vmem:[%s2] sm:$0xf]
      %v543 = vld [vmem:[%s2 + $0x4] sm:$0xf]
      %v544 = vld [vmem:[%s2 + $0x8] sm:$0xf]
      %v545 = vld [vmem:[#allocation2] sm:$0xff]
      %v546 = vld [vmem:[#allocation2 + $0x8] sm:$0xf]
      %v547 = vld [vmem:[#allocation2 + $0xc] sm:$0xff]
      %v548 = vld [vmem:[#allocation2 + $0x14] sm:$0xf]
      %v549 = vld [vmem:[#allocation2 + $0x18] sm:$0xff]
      %v550 = vld [vmem:[#allocation2 + $0x20] sm:$0xf]
      %v551 = vld [vmem:[#allocation2 + $0x24] sm:$0xff]
      %v552 = vld [vmem:[#allocation2 + $0x2c] sm:$0xf]
      %v553 = vld [vmem:[#allocation2 + $0x30] sm:$0xff]
      %v554 = vld [vmem:[#allocation2 + $0x38] sm:$0xf]
      %v555 = vld [vmem:[#allocation2 + $0x3c] sm:$0xff]
      %v556 = vld [vmem:[#allocation2 + $0x44] sm:$0xf]
      %v557 = vld [vmem:[#allocation2 + $0x48] sm:$0xff]
      %v558 = vld [vmem:[#allocation2 + $0x50] sm:$0xf]
      %v559 = vld [vmem:[#allocation2 + $0x54] sm:$0xff]
      %v560 = vld [vmem:[#allocation2 + $0x5c] sm:$0xf]
      %v561 = vld [vmem:[#allocation2 + $0x60] sm:$0xff]
      %v562 = vld [vmem:[#allocation2 + $0x68] sm:$0xf]
      %v563 = vld [vmem:[#allocation2 + $0x6c] sm:$0xff]
      %v564 = vld [vmem:[#allocation2 + $0x74] sm:$0xf]
      %v565 = vld [vmem:[#allocation2 + $0x78] sm:$0xff]
      %v566 = vld [vmem:[#allocation2 + $0x80] sm:$0xf]
      %v567 = vld [vmem:[#allocation2 + $0x84] sm:$0xff]
      %v568 = vld [vmem:[#allocation2 + $0x8c] sm:$0xf]
      %v569 = vld [vmem:[#allocation2 + $0x90] sm:$0xff]
      %v570 = vld [vmem:[#allocation2 + $0x98] sm:$0xf]
      %v571 = vld [vmem:[#allocation2 + $0x9c] sm:$0x33]
      %v572 = vld [vmem:[#allocation2 + $0xa4] sm:$0x3]
      %v576 = vunpack.c.l.b16 %v542
      %v577 = vunpack.c.l.b16 %v543
      %v578 = vunpack.c.l.b16 %v544
      %v579 = vpack.c.b16 %v577, %v576
      %v580 = vpack.c.b16 %v578, %v578
      %v609 = vunpack.c.l.b16 %v545
      %v610 = vunpack.c.h.b16 %v545
      %v611 = vunpack.c.l.b16 %v546
      %v612 = vunpack.c.l.b16 %v547
      %v613 = vunpack.c.h.b16 %v547
      %v614 = vunpack.c.l.b16 %v548
      %v615 = vunpack.c.l.b16 %v549
      %v616 = vunpack.c.h.b16 %v549
      %v617 = vunpack.c.l.b16 %v550
      %v618 = vunpack.c.l.b16 %v551
      %v619 = vunpack.c.h.b16 %v551
      %v620 = vunpack.c.l.b16 %v552
      %v621 = vunpack.c.l.b16 %v553
      %v622 = vunpack.c.h.b16 %v553
      %v623 = vunpack.c.l.b16 %v554
      %v624 = vunpack.c.l.b16 %v555
      %v625 = vunpack.c.h.b16 %v555
      %v626 = vunpack.c.l.b16 %v556
      %v627 = vunpack.c.l.b16 %v557
      %v628 = vunpack.c.h.b16 %v557
      %v629 = vunpack.c.l.b16 %v558
      %v630 = vunpack.c.l.b16 %v559
      %v631 = vunpack.c.h.b16 %v559
      %v632 = vunpack.c.l.b16 %v560
      %v633 = vunpack.c.l.b16 %v561
      %v634 = vunpack.c.h.b16 %v561
      %v635 = vunpack.c.l.b16 %v562
      %v636 = vunpack.c.l.b16 %v563
      %v637 = vunpack.c.h.b16 %v563
      %v638 = vunpack.c.l.b16 %v564
      %v639 = vunpack.c.l.b16 %v565
      %v640 = vunpack.c.h.b16 %v565
      %v641 = vunpack.c.l.b16 %v566
      %v642 = vunpack.c.l.b16 %v567
      %v643 = vunpack.c.h.b16 %v567
      %v644 = vunpack.c.l.b16 %v568
      %v645 = vunpack.c.l.b16 %v569
      %v646 = vunpack.c.h.b16 %v569
      %v647 = vunpack.c.l.b16 %v570
      %v648 = vunpack.c.l.b16 %v571
      %v649 = vunpack.c.h.b16 %v571
      %v650 = vunpack.c.l.b16 %v572
      %v651 = vpack.c.b16 %v612, %v609
      %v652 = vpack.c.b16 %v613, %v610
      %v653 = vpack.c.b16 %v614, %v611
      %v654 = vpack.c.b16 %v618, %v615
      %v655 = vpack.c.b16 %v619, %v616
      %v656 = vpack.c.b16 %v620, %v617
      %v657 = vpack.c.b16 %v624, %v621
      %v658 = vpack.c.b16 %v625, %v622
      %v659 = vpack.c.b16 %v626, %v623
      %v660 = vpack.c.b16 %v630, %v627
      %v661 = vpack.c.b16 %v631, %v628
      %v662 = vpack.c.b16 %v632, %v629
      %v663 = vpack.c.b16 %v636, %v633
      %v664 = vpack.c.b16 %v637, %v634
      %v665 = vpack.c.b16 %v638, %v635
      %v666 = vpack.c.b16 %v642, %v639
      %v667 = vpack.c.b16 %v643, %v640
      %v668 = vpack.c.b16 %v644, %v641
      %v669 = vpack.c.b16 %v648, %v645
      %v670 = vpack.c.b16 %v649, %v646
      %v671 = vpack.c.b16 %v650, %v647
      %vm690 = vcmask 883712
      %v692 = vsel %vm690, %v579, 0
      %v695 = vsel %vm690, %v580, 0
      %vm697 = vcmask 1045504
      %v699 = vsel %vm697, %v669, 0
      %v702 = vsel %vm697, %v670, 0
      %v705 = vsel %vm697, %v671, 0
      %707 = vmatprep.subr.bf16.mxu0 0
      %708 = vmatpush1.bf16.msra.mxu0 0
      %709 = vmatprep.subr.bf16.mxu0 %v702
      %710 = vmatpush1.bf16.msra.mxu0 %v699
      %711 = vmatprep.subr.bf16.mxu0 %v667
      %712 = vmatpush1.bf16.msra.mxu0 %v666
      %713 = vmatprep.subr.bf16.mxu0 %v664
      %714 = vmatpush1.bf16.msra.mxu0 %v663
      %715 = vmatprep.subr.bf16.mxu0 %v661
      %716 = vmatpush1.bf16.msra.mxu0 %v660
      %717 = vmatprep.subr.bf16.mxu0 %v658
      %718 = vmatpush1.bf16.msra.mxu0 %v657
      %719 = vmatprep.subr.bf16.mxu0 %v655
      %720 = vmatpush1.bf16.msra.mxu0 %v654
      %721 = vmatprep.subr.bf16.mxu0 %v652
      %722 = vmatpush1.bf16.msra.mxu0 %v651
      %723 = vmatprep.subr.bf16.mxu0 0
      %724 = vmatpush2.bf16.msra.mxu0 0
      %725 = vmatprep.subr.bf16.mxu0 0
      %726 = vmatpush2.bf16.msra.mxu0 0
      %727 = vmatprep.subr.bf16.mxu0 0
      %728 = vmatpush2.bf16.msra.mxu0 0
      %729 = vmatprep.subr.bf16.mxu0 0
      %730 = vmatpush2.bf16.msra.mxu0 0
      %731 = vmatprep.subr.bf16.mxu0 0
      %732 = vmatpush2.bf16.msra.mxu0 0
      %733 = vmatprep.subr.bf16.mxu0 0
      %734 = vmatpush2.bf16.msra.mxu0 0
      %735 = vmatprep.subr.bf16.mxu0 0
      %736 = vmatpush2.bf16.msra.mxu0 0
      %737 = vmatprep.subr.bf16.mxu0 0
      %738 = vmatpush2.bf16.msra.mxu0 0
      %739 = vmatprep.mubr.bf16.mxu0 0
      %740 = vmatmul.mubr.bf16.gmra.mxu0 %v692
      %v741 = vpop.f32.mrf.mxu0
      %v742 = vadd.f32 0.0, %v741
      %v743 = vpop.f32.mrf.mxu0
      %v744 = vadd.f32 0.0, %v743
      %v745 = vpop.f32.mrf.mxu0
      %v746 = vadd.f32 0.0, %v745
      %v747 = vpop.f32.mrf.mxu0
      %v748 = vadd.f32 0.0, %v747
      %749 = vmatprep.mubr.bf16.mxu0 0
      %750 = vmatmul.mubr.bf16.gmra.mxu0 %v695
      %v751 = vpop.f32.mrf.mxu0
      %v752 = vadd.f32 0.0, %v751
      %v753 = vpop.f32.mrf.mxu0
      %v754 = vadd.f32 0.0, %v753
      %v755 = vpop.f32.mrf.mxu0
      %v756 = vpop.f32.mrf.mxu0
      %757 = vdwg.mxu0
      %758 = vmatprep.subr.bf16.mxu0 0
      %759 = vmatpush1.bf16.msra.mxu0 0
      %760 = vmatprep.subr.bf16.mxu0 0
      %761 = vmatpush1.bf16.msra.mxu0 %v705
      %762 = vmatprep.subr.bf16.mxu0 0
      %763 = vmatpush1.bf16.msra.mxu0 %v668
      %764 = vmatprep.subr.bf16.mxu0 0
      %765 = vmatpush1.bf16.msra.mxu0 %v665
      %766 = vmatprep.subr.bf16.mxu0 0
      %767 = vmatpush1.bf16.msra.mxu0 %v662
      %768 = vmatprep.subr.bf16.mxu0 0
      %769 = vmatpush1.bf16.msra.mxu0 %v659
      %770 = vmatprep.subr.bf16.mxu0 0
      %771 = vmatpush1.bf16.msra.mxu0 %v656
      %772 = vmatprep.subr.bf16.mxu0 0
      %773 = vmatpush1.bf16.msra.mxu0 %v653
      %774 = vmatprep.subr.bf16.mxu0 0
      %775 = vmatpush2.bf16.msra.mxu0 0
      %776 = vmatprep.subr.bf16.mxu0 0
      %777 = vmatpush2.bf16.msra.mxu0 0
      %778 = vmatprep.subr.bf16.mxu0 0
      %779 = vmatpush2.bf16.msra.mxu0 0
      %780 = vmatprep.subr.bf16.mxu0 0
      %781 = vmatpush2.bf16.msra.mxu0 0
      %782 = vmatprep.subr.bf16.mxu0 0
      %783 = vmatpush2.bf16.msra.mxu0 0
      %784 = vmatprep.subr.bf16.mxu0 0
      %785 = vmatpush2.bf16.msra.mxu0 0
      %786 = vmatprep.subr.bf16.mxu0 0
      %787 = vmatpush2.bf16.msra.mxu0 0
      %788 = vmatprep.subr.bf16.mxu0 0
      %789 = vmatpush2.bf16.msra.mxu0 0
      %790 = vmatprep.mubr.bf16.mxu0 0
      %791 = vmatmul.mubr.bf16.gmra.mxu0 %v692
      %v792 = vpop.f32.mrf.mxu0
      %v793 = vadd.f32 0.0, %v792
      %v794 = vpop.f32.mrf.mxu0
      %v795 = vpop.f32.mrf.mxu0
      %v796 = vadd.f32 0.0, %v795
      %v797 = vpop.f32.mrf.mxu0
      %798 = vmatprep.mubr.bf16.mxu0 0
      %799 = vmatmul.mubr.bf16.gmra.mxu0 %v695
      %v800 = vpop.f32.mrf.mxu0
      %v801 = vadd.f32 0.0, %v800
      %v802 = vpop.f32.mrf.mxu0
      %v803 = vpop.f32.mrf.mxu0
      %v804 = vpop.f32.mrf.mxu0
      %805 = vdwg.mxu0
      %v806 = vld [vmem:[%s4] sm:$0xff]
      %v807 = vld [vmem:[%s4 + $0x8] sm:$0xff]
      %809 = vset.pattern.permute.xlu0 0
      %810 = vperm.xlu0 %809, %v806
      %v811 = vpop.permute.xlu0 %810
      %814 = vset.pattern.permute.xlu0 0
      %815 = vperm.xlu0 %814, %v807
      %v816 = vpop.permute.xlu0 %815
      %v818 = vadd.f32 %v742, %v811
      %v819 = vadd.f32 %v744, %v811
      %v820 = vadd.f32 %v793, %v811
      %v821 = vadd.f32 %v746, %v816
      %v822 = vadd.f32 %v748, %v816
      %v823 = vadd.f32 %v796, %v816
      %v824 = vxor.u32 %v818, 2147483648
      %v825 = vxor.u32 %v819, 2147483648
      %v826 = vxor.u32 %v820, 2147483648
      %v827 = vxor.u32 %v821, 2147483648
      %v828 = vxor.u32 %v822, 2147483648
      %v829 = vxor.u32 %v823, 2147483648
      %v830 = vmul.f32 %v824, 1.442695
      %v831 = vpow.pop %v830
      %v832 = vmul.f32 %v825, 1.442695
      %v833 = vpow.pop %v832
      %v834 = vmul.f32 %v826, 1.442695
      %v835 = vpow.pop %v834
      %v836 = vmul.f32 %v827, 1.442695
      %v837 = vpow.pop %v836
      %v838 = vmul.f32 %v828, 1.442695
      %v839 = vpow.pop %v838
      %v840 = vmul.f32 %v829, 1.442695
      %v841 = vpow.pop %v840
      %v842 = vadd.f32 %v831, 1.0
      %v843 = vadd.f32 %v833, 1.0
      %v844 = vadd.f32 %v835, 1.0
      %v845 = vadd.f32 %v837, 1.0
      %v846 = vadd.f32 %v839, 1.0
      %v847 = vadd.f32 %v841, 1.0
      %v848 = vrcp.pop %v842
      %v849 = vmul.f32 1.0, %v848
      %v850 = vrcp.pop %v843
      %v851 = vmul.f32 1.0, %v850
      %v852 = vrcp.pop %v844
      %v853 = vmul.f32 1.0, %v852
      %v854 = vrcp.pop %v845
      %v855 = vmul.f32 1.0, %v854
      %v856 = vrcp.pop %v846
      %v857 = vmul.f32 1.0, %v856
      %v858 = vrcp.pop %v847
      %v859 = vmul.f32 1.0, %v858
      %864 = vrot.lane.b32.xlu0 %v274, 109
      %v865 = vpop.permute.xlu0 %864
      %866 = vrot.lane.b32.xlu0 %v275, 109
      %v867 = vpop.permute.xlu0 %866
      %868 = vrot.lane.b32.xlu0 %v276, 109
      %v869 = vpop.permute.xlu0 %868
      %870 = vrot.lane.b32.xlu0 %v277, 109
      %v871 = vpop.permute.xlu0 %870
      %vm872 = vcmask 891904
      %v873 = vsel %vm872, %v865, %v867
      %v874 = vsel %vm872, %v867, %v869
      %v875 = vsel %vm872, %v869, %v871
      %v879 = vmul.f32 %v849, %v873
      %v880 = vmul.f32 %v851, %v874
      %v881 = vmul.f32 %v853, %v875
      %vm882 = vcmask 1044328
      %883 = vst.msk [vmem:[#allocation4] sm:$0xf] %vm882, 0
      %vm884 = vcmask 150528
      %885 = vst.msk [vmem:[#allocation4 + $0x10] sm:$0xf] %vm884, 0
      %v886 = vpack.c.bf16 %v879, %v879
      %v887 = vpack.c.bf16 %v880, %v880
      %v888 = vpack.c.bf16 %v881, %v881
      %v892 = vunpack.c.l.b16 %v886
      %v893 = vunpack.c.l.b16 %v887
      %v894 = vunpack.c.l.b16 %v888
      %v895 = vpack.c.b16 %v893, %v892
      %v896 = vpack.c.b16 %v894, %v894
      %899 = vst [vmem:[#allocation4 + $0x4] sm:$0xff] %v895
      %900 = vst [vmem:[#allocation4 + $0xc] sm:$0xf] %v896
      %v901 = vld [vmem:[#allocation4] sm:$0xff]
      %v902 = vld [vmem:[#allocation4 + $0x8] sm:$0xff]
      %905 = vrot.lane.b32.xlu0 %v901, 19
      %v906 = vpop.permute.xlu0 %905
      %907 = vrot.lane.b32.xlu0 %v902, 19
      %v908 = vpop.permute.xlu0 %907
      %v909 = vrot.slane %v906, 4
      %v910 = vrot.slane %v908, 4
      %v911 = vsel %vm323, %v909, %v910
      %vm912 = vcmask 154624
      %v913 = vsel %vm912, %v906, %v911
      %v914 = vsel %vm912, %v908, %v910
      %917 = vst [vmem:[#allocation3] sm:$0xff] %v913
      %918 = vst [vmem:[#allocation3 + $0x8] sm:$0xf] %v914
      %v919 = vld [vmem:[#allocation4] sm:$0xff]
      %v920 = vld [vmem:[#allocation4 + $0x8] sm:$0xff]
      %923 = vrot.lane.b32.xlu0 %v919, 18
      %v924 = vpop.permute.xlu0 %923
      %925 = vrot.lane.b32.xlu0 %v920, 18
      %v926 = vpop.permute.xlu0 %925
      %v927 = vrot.slane %v924, 4
      %v928 = vrot.slane %v926, 4
      %v929 = vsel %vm323, %v927, %v928
      %vm930 = vcmask 146432
      %v931 = vsel %vm930, %v924, %v929
      %v932 = vsel %vm930, %v926, %v928
      %935 = vst [vmem:[#allocation3 + $0xc] sm:$0xff] %v931
      %936 = vst [vmem:[#allocation3 + $0x14] sm:$0xf] %v932
      %v937 = vld [vmem:[#allocation4] sm:$0xff]
      %v938 = vld [vmem:[#allocation4 + $0x8] sm:$0xff]
      %941 = vrot.lane.b32.xlu0 %v937, 17
      %v942 = vpop.permute.xlu0 %941
      %943 = vrot.lane.b32.xlu0 %v938, 17
      %v944 = vpop.permute.xlu0 %943
      %v945 = vrot.slane %v942, 4
      %v946 = vrot.slane %v944, 4
      %v947 = vsel %vm323, %v945, %v946
      %vm948 = vcmask 138240
      %v949 = vsel %vm948, %v942, %v947
      %v950 = vsel %vm948, %v944, %v946
      %953 = vst [vmem:[#allocation3 + $0x18] sm:$0xff] %v949
      %954 = vst [vmem:[#allocation3 + $0x20] sm:$0xf] %v950
      %v955 = vld [vmem:[#allocation4] sm:$0xff]
      %v956 = vld [vmem:[#allocation4 + $0x8] sm:$0xff]
      %959 = vrot.lane.b32.xlu0 %v955, 1
      %v960 = vpop.permute.xlu0 %959
      %961 = vrot.lane.b32.xlu0 %v956, 1
      %v962 = vpop.permute.xlu0 %961
      %v963 = vrot.slane %v960, 4
      %v964 = vrot.slane %v962, 4
      %v965 = vsel %vm323, %v963, %v964
      %vm966 = vcmask 7168
      %v967 = vsel %vm966, %v960, %v965
      %v968 = vsel %vm966, %v962, %v964
      %971 = vst [vmem:[#allocation3 + $0x24] sm:$0xff] %v967
      %972 = vst [vmem:[#allocation3 + $0x2c] sm:$0xf] %v968
      %v973 = vld [vmem:[#allocation4 + $0x4] sm:$0xff]
      %v974 = vld [vmem:[#allocation4 + $0xc] sm:$0xf]
      %975 = vst [vmem:[#allocation3 + $0x30] sm:$0xff] %v973
      %976 = vst [vmem:[#allocation3 + $0x38] sm:$0xf] %v974
      %v977 = vld [vmem:[#allocation4 + $0x4] sm:$0xff]
      %v978 = vld [vmem:[#allocation4 + $0xc] sm:$0xff]
      %981 = vrot.lane.b32.xlu0 %v977, 127
      %v982 = vpop.permute.xlu0 %981
      %983 = vrot.lane.b32.xlu0 %v978, 127
      %v984 = vpop.permute.xlu0 %983
      %v985 = vrot.slane %v982, 4
      %v986 = vrot.slane %v984, 4
      %v987 = vsel %vm323, %v985, %v986
      %v988 = vsel %vm325, %v982, %v987
      %v989 = vsel %vm325, %v984, %v986
      %992 = vst [vmem:[#allocation3 + $0x3c] sm:$0xff] %v988
      %993 = vst [vmem:[#allocation3 + $0x44] sm:$0xf] %v989
      %v994 = vld [vmem:[#allocation4 + $0x4] sm:$0xff]
      %v995 = vld [vmem:[#allocation4 + $0xc] sm:$0xff]
      %998 = vrot.lane.b32.xlu0 %v994, 111
      %v999 = vpop.permute.xlu0 %998
      %1000 = vrot.lane.b32.xlu0 %v995, 111
      %v1001 = vpop.permute.xlu0 %1000
      %v1002 = vrot.slane %v999, 4
      %v1003 = vrot.slane %v1001, 4
      %v1004 = vsel %vm323, %v1002, %v1003
      %vm1005 = vcmask 908288
      %v1006 = vsel %vm1005, %v999, %v1004
      %v1007 = vsel %vm1005, %v1001, %v1003
      %1010 = vst [vmem:[#allocation3 + $0x48] sm:$0xff] %v1006
      %1011 = vst [vmem:[#allocation3 + $0x50] sm:$0xf] %v1007
      %v1012 = vld [vmem:[#allocation4 + $0x4] sm:$0xff]
      %v1013 = vld [vmem:[#allocation4 + $0xc] sm:$0xff]
      %1016 = vrot.lane.b32.xlu0 %v1012, 110
      %v1017 = vpop.permute.xlu0 %1016
      %1018 = vrot.lane.b32.xlu0 %v1013, 110
      %v1019 = vpop.permute.xlu0 %1018
      %v1020 = vrot.slane %v1017, 4
      %v1021 = vrot.slane %v1019, 4
      %v1022 = vsel %vm323, %v1020, %v1021
      %v1023 = vsel %vm387, %v1017, %v1022
      %v1024 = vsel %vm387, %v1019, %v1021
      %1027 = vst [vmem:[#allocation3 + $0x54] sm:$0xff] %v1023
      %1028 = vst [vmem:[#allocation3 + $0x5c] sm:$0xf] %v1024
      %v1029 = vld [vmem:[#allocation4 + $0x4] sm:$0xff]
      %v1030 = vld [vmem:[#allocation4 + $0xc] sm:$0xff]
      %1033 = vrot.lane.b32.xlu0 %v1029, 109
      %v1034 = vpop.permute.xlu0 %1033
      %1035 = vrot.lane.b32.xlu0 %v1030, 109
      %v1036 = vpop.permute.xlu0 %1035
      %v1037 = vrot.slane %v1034, 4
      %v1038 = vrot.slane %v1036, 4
      %v1039 = vsel %vm323, %v1037, %v1038
      %v1040 = vsel %vm414, %v1034, %v1039
      %v1041 = vsel %vm414, %v1036, %v1038
      %1044 = vst [vmem:[#allocation3 + $0x60] sm:$0xff] %v1040
      %1045 = vst [vmem:[#allocation3 + $0x68] sm:$0xf] %v1041
      %v1046 = vld [vmem:[%s3] sm:$0xf]
      %v1047 = vld [vmem:[#allocation3] sm:$0xff]
      %v1048 = vld [vmem:[#allocation3 + $0x8] sm:$0xf]
      %v1049 = vld [vmem:[#allocation3 + $0xc] sm:$0xff]
      %v1050 = vld [vmem:[#allocation3 + $0x14] sm:$0xf]
      %v1051 = vld [vmem:[#allocation3 + $0x18] sm:$0xff]
      %v1052 = vld [vmem:[#allocation3 + $0x20] sm:$0xf]
      %v1053 = vld [vmem:[#allocation3 + $0x24] sm:$0xff]
      %v1054 = vld [vmem:[#allocation3 + $0x2c] sm:$0xf]
      %v1055 = vld [vmem:[#allocation3 + $0x30] sm:$0xff]
      %v1056 = vld [vmem:[#allocation3 + $0x38] sm:$0xf]
      %v1057 = vld [vmem:[#allocation3 + $0x3c] sm:$0xff]
      %v1058 = vld [vmem:[#allocation3 + $0x44] sm:$0xf]
      %v1059 = vld [vmem:[#allocation3 + $0x48] sm:$0xff]
      %v1060 = vld [vmem:[#allocation3 + $0x50] sm:$0xf]
      %v1061 = vld [vmem:[#allocation3 + $0x54] sm:$0xff]
      %v1062 = vld [vmem:[#allocation3 + $0x5c] sm:$0xf]
      %v1063 = vld [vmem:[#allocation3 + $0x60] sm:$0xff]
      %v1064 = vld [vmem:[#allocation3 + $0x68] sm:$0xf]
      %v1083 = vunpack.c.l.b16 %v1047
      %v1084 = vunpack.c.h.b16 %v1047
      %v1085 = vunpack.c.l.b16 %v1048
      %v1086 = vunpack.c.l.b16 %v1049
      %v1087 = vunpack.c.h.b16 %v1049
      %v1088 = vunpack.c.l.b16 %v1050
      %v1089 = vunpack.c.l.b16 %v1051
      %v1090 = vunpack.c.h.b16 %v1051
      %v1091 = vunpack.c.l.b16 %v1052
      %v1092 = vunpack.c.l.b16 %v1053
      %v1093 = vunpack.c.h.b16 %v1053
      %v1094 = vunpack.c.l.b16 %v1054
      %v1095 = vunpack.c.l.b16 %v1055
      %v1096 = vunpack.c.h.b16 %v1055
      %v1097 = vunpack.c.l.b16 %v1056
      %v1098 = vunpack.c.l.b16 %v1057
      %v1099 = vunpack.c.h.b16 %v1057
      %v1100 = vunpack.c.l.b16 %v1058
      %v1101 = vunpack.c.l.b16 %v1059
      %v1102 = vunpack.c.h.b16 %v1059
      %v1103 = vunpack.c.l.b16 %v1060
      %v1104 = vunpack.c.l.b16 %v1061
      %v1105 = vunpack.c.h.b16 %v1061
      %v1106 = vunpack.c.l.b16 %v1062
      %v1107 = vunpack.c.l.b16 %v1063
      %v1108 = vunpack.c.h.b16 %v1063
      %v1109 = vunpack.c.l.b16 %v1064
      %v1110 = vpack.c.b16 %v1086, %v1083
      %v1111 = vpack.c.b16 %v1087, %v1084
      %v1112 = vpack.c.b16 %v1088, %v1085
      %v1113 = vpack.c.b16 %v1092, %v1089
      %v1114 = vpack.c.b16 %v1093, %v1090
      %v1115 = vpack.c.b16 %v1094, %v1091
      %v1116 = vpack.c.b16 %v1098, %v1095
      %v1117 = vpack.c.b16 %v1099, %v1096
      %v1118 = vpack.c.b16 %v1100, %v1097
      %v1119 = vpack.c.b16 %v1104, %v1101
      %v1120 = vpack.c.b16 %v1105, %v1102
      %v1121 = vpack.c.b16 %v1106, %v1103
      %v1122 = vpack.c.b16 %v1107, %v1107
      %v1123 = vpack.c.b16 %v1108, %v1108
      %v1124 = vpack.c.b16 %v1109, %v1109
      %vm1137 = vcmask 588800
      %v1139 = vsel %vm1137, %v1046, 0
      %vm1141 = vcmask 1043456
      %v1143 = vsel %vm1141, %v1122, 0
      %v1146 = vsel %vm1141, %v1123, 0
      %v1149 = vsel %vm1141, %v1124, 0
      %1151 = vmatprep.subr.bf16.mxu0 0
      %1152 = vmatpush1.bf16.msra.mxu0 0
      %1153 = vmatprep.subr.bf16.mxu0 0
      %1154 = vmatpush1.bf16.msra.mxu0 0
      %1155 = vmatprep.subr.bf16.mxu0 0
      %1156 = vmatpush1.bf16.msra.mxu0 0
      %1157 = vmatprep.subr.bf16.mxu0 %v1146
      %1158 = vmatpush1.bf16.msra.mxu0 %v1143
      %1159 = vmatprep.subr.bf16.mxu0 %v1120
      %1160 = vmatpush1.bf16.msra.mxu0 %v1119
      %1161 = vmatprep.subr.bf16.mxu0 %v1117
      %1162 = vmatpush1.bf16.msra.mxu0 %v1116
      %1163 = vmatprep.subr.bf16.mxu0 %v1114
      %1164 = vmatpush1.bf16.msra.mxu0 %v1113
      %1165 = vmatprep.subr.bf16.mxu0 %v1111
      %1166 = vmatpush1.bf16.msra.mxu0 %v1110
      %1167 = vmatprep.subr.bf16.mxu0 0
      %1168 = vmatpush2.bf16.msra.mxu0 0
      %1169 = vmatprep.subr.bf16.mxu0 0
      %1170 = vmatpush2.bf16.msra.mxu0 0
      %1171 = vmatprep.subr.bf16.mxu0 0
      %1172 = vmatpush2.bf16.msra.mxu0 0
      %1173 = vmatprep.subr.bf16.mxu0 0
      %1174 = vmatpush2.bf16.msra.mxu0 0
      %1175 = vmatprep.subr.bf16.mxu0 0
      %1176 = vmatpush2.bf16.msra.mxu0 0
      %1177 = vmatprep.subr.bf16.mxu0 0
      %1178 = vmatpush2.bf16.msra.mxu0 0
      %1179 = vmatprep.subr.bf16.mxu0 0
      %1180 = vmatpush2.bf16.msra.mxu0 0
      %1181 = vmatprep.subr.bf16.mxu0 0
      %1182 = vmatpush2.bf16.msra.mxu0 0
      %1183 = vmatprep.mubr.bf16.mxu0 0
      %1184 = vmatmul.mubr.bf16.gmra.mxu0 %v1139
      %v1185 = vpop.f32.mrf.mxu0
      %v1186 = vadd.f32 0.0, %v1185
      %v1187 = vpop.f32.mrf.mxu0
      %v1188 = vadd.f32 0.0, %v1187
      %v1189 = vpop.f32.mrf.mxu0
      %v1190 = vpop.f32.mrf.mxu0
      %1191 = vdwg.mxu0
      %1192 = vmatprep.subr.bf16.mxu0 0
      %1193 = vmatpush1.bf16.msra.mxu0 0
      %1194 = vmatprep.subr.bf16.mxu0 0
      %1195 = vmatpush1.bf16.msra.mxu0 0
      %1196 = vmatprep.subr.bf16.mxu0 0
      %1197 = vmatpush1.bf16.msra.mxu0 0
      %1198 = vmatprep.subr.bf16.mxu0 0
      %1199 = vmatpush1.bf16.msra.mxu0 %v1149
      %1200 = vmatprep.subr.bf16.mxu0 0
      %1201 = vmatpush1.bf16.msra.mxu0 %v1121
      %1202 = vmatprep.subr.bf16.mxu0 0
      %1203 = vmatpush1.bf16.msra.mxu0 %v1118
      %1204 = vmatprep.subr.bf16.mxu0 0
      %1205 = vmatpush1.bf16.msra.mxu0 %v1115
      %1206 = vmatprep.subr.bf16.mxu0 0
      %1207 = vmatpush1.bf16.msra.mxu0 %v1112
      %1208 = vmatprep.subr.bf16.mxu0 0
      %1209 = vmatpush2.bf16.msra.mxu0 0
      %1210 = vmatprep.subr.bf16.mxu0 0
      %1211 = vmatpush2.bf16.msra.mxu0 0
      %1212 = vmatprep.subr.bf16.mxu0 0
      %1213 = vmatpush2.bf16.msra.mxu0 0
      %1214 = vmatprep.subr.bf16.mxu0 0
      %1215 = vmatpush2.bf16.msra.mxu0 0
      %1216 = vmatprep.subr.bf16.mxu0 0
      %1217 = vmatpush2.bf16.msra.mxu0 0
      %1218 = vmatprep.subr.bf16.mxu0 0
      %1219 = vmatpush2.bf16.msra.mxu0 0
      %1220 = vmatprep.subr.bf16.mxu0 0
      %1221 = vmatpush2.bf16.msra.mxu0 0
      %1222 = vmatprep.subr.bf16.mxu0 0
      %1223 = vmatpush2.bf16.msra.mxu0 0
      %1224 = vmatprep.mubr.bf16.mxu0 0
      %1225 = vmatmul.mubr.bf16.gmra.mxu0 %v1139
      %v1226 = vpop.f32.mrf.mxu0
      %v1227 = vadd.f32 0.0, %v1226
      %v1228 = vpop.f32.mrf.mxu0
      %v1229 = vpop.f32.mrf.mxu0
      %v1230 = vpop.f32.mrf.mxu0
      %1231 = vdwg.mxu0
      %v1232 = vadd.f32 %v752, %v1186
      %v1233 = vadd.f32 %v754, %v1188
      %v1234 = vadd.f32 %v801, %v1227
      %v1235 = vld [vmem:[%s5] sm:$0xff]
      %1237 = vset.pattern.permute.xlu0 0
      %1238 = vperm.xlu0 %1237, %v1235
      %v1239 = vpop.permute.xlu0 %1238
      %v1241 = vadd.f32 %v1232, %v1239
      %v1242 = vadd.f32 %v1233, %v1239
      %v1243 = vadd.f32 %v1234, %v1239
      %v1244 = vtanh.pop %v1241
      %v1245 = vtanh.pop %v1242
      %v1246 = vtanh.pop %v1243
      %v1247 = vmul.f32 %v855, %v873
      %v1248 = vmul.f32 %v857, %v874
      %v1249 = vmul.f32 %v859, %v875
      %v1250 = vsub.f32 1.0, %v855
      %v1251 = vsub.f32 1.0, %v857
      %v1252 = vsub.f32 1.0, %v859
      %v1253 = vmul.f32 %v1250, %v1244
      %v1254 = vmul.f32 %v1251, %v1245
      %v1255 = vmul.f32 %v1252, %v1246
      %v1256 = vadd.f32 %v1247, %v1253
      %v1257 = vadd.f32 %v1248, %v1254
      %v1258 = vadd.f32 %v1249, %v1255
      %1259 = vst [vmem:[%s271] sm:$0xff] %v1256
      %1260 = vst [vmem:[%s271 + $0x8] sm:$0xff] %v1257
      %1261 = vst [vmem:[%s271 + $0x10] sm:$0xff] %v1258
      %p1262 = scmp.lt.s32.totalorder %s17, 1
      %s1263 = scalar_select %p1262, %s17, 1
      %s1264 = smul.addr %s1263, 3
      %s1265 = smul.addr %s1264, 8
      %s1266 = scalar_lea.vmem %s6, %s1265
      // Predicated region
      $region45: #{_lambda_.1} parent=43 // pred_check
        %p1267 = pneg %p171
      $region46: #{_lambda_.1} parent=43 // pred_check_branch
        %1269 = sbr.rel (%p1267) target = $region48
      $region47: #{_lambda_.1} parent=43 // pred_region
        _
      $region48: #{_lambda_.1} parent=43 // pred_fallthru
        _
    $region44: #{_lambda_.1} parent=5 // pred_fallthru
      _
    %p1270 = scmp.le.s32.totalorder 2, %s12
    // Predicated region
    $region49: #{_lambda_.1} parent=5 // pred_check
      %p1271 = pneg %p1270
    $region50: #{_lambda_.1} parent=5 // pred_check_branch
      %1273 = sbr.rel (%p1271) target = $region52
    $region51: #{_lambda_.1} parent=5 // pred_region
      %s1274 = ssub.s32 %s12, 2
      // Predicated region
      $region53: #{_lambda_.1} parent=51 // pred_check
        %p1275 = pneg %p177
      $region54: #{_lambda_.1} parent=51 // pred_check_branch
        %1277 = sbr.rel (%p1275) target = $region56
      $region55: #{_lambda_.1} parent=51 // pred_region
        %p1278 = scmp.lt.s32.totalorder %s18, 1
        %s1279 = scalar_select %p1278, %s18, 1
        %s1280 = smul.addr %s1279, 3
        %s1281 = smul.addr %s1280, 8
        %s1282 = scalar_lea.vmem %s6, %s1281
      $region56: #{_lambda_.1} parent=51 // pred_fallthru
        _
    $region52: #{_lambda_.1} parent=5 // pred_fallthru
      _
  $region6: #{_lambda_.1} parent=0 // loop_footer
    %s16 = sadd.s32 1, %s12
  $region7: #{_lambda_.1} parent=0 // loop_footer_branch
    %11 = sbr.rel target = $region3
  $region8: #{_lambda_.1} parent=0 // loop_exit
    _

</llo_original>
